<compile_context>
chip_gen: v6e
topology: v6e:2x2x1
jax: 0.10.0
libtpu: 0.0.40
codegen_flags: <defaults>
</compile_context>

<pallas_src>
import functools

import jax
import jax.numpy as jnp
import numpy as np
from jax.experimental import pallas as pl
from jax.experimental.pallas import tpu as pltpu


# ----------------------------- model dimensions ----------------------------
_L0, _C0 = 26, 4           # input  (seq_len=26, num_features=4)
_L1, _C1 = 24, 8           # after conv1 (k=3)
_L2, _C2 = 22, 16          # after conv2
_L3, _C3 = 20, 32          # after conv3 -> flatten 640
_FC1 = 256
_FC2 = 128

# Padded matmul dims (multiples of 128 so Mosaic never pads/relayouts operands).
_K0 = 128                  # 4*26 = 104 -> 128   (x lanes / T1 rows)
_N1 = 256                  # 8*24 = 192 -> 256   (T1 cols / T2 rows)
_N2 = 384                  # 16*22 = 352 -> 384  (T2 cols / T3 rows)
_N3 = 640                  # 32*20 = 640         (T3 cols / fc1 rows)

# Layout of the single concatenated f32 vector operand (biases + fused fc2/fc3).
_OFF_B1 = 0                 # conv1 bias, one value per output column
_OFF_B2 = _OFF_B1 + _N1     # 256
_OFF_B3 = _OFF_B2 + _N2     # 640
_OFF_BF1 = _OFF_B3 + _N3    # 1280
_OFF_W23 = _OFF_BF1 + _FC1  # 1536   fused fc3.W @ fc2.W row (256 values)
_OFF_B23 = _OFF_W23 + _FC1  # 1792   fused bias, replicated over 128 lanes
_VEC_LEN = _OFF_B23 + 128   # 1920

_BLOCK_B = 512             # max batch rows per grid step
_SPLIT_MIN_B = 256         # batch size at which we force >=2 grid steps (v7x megacore)


def _round_up(n, m):
    return ((n + m - 1) // m) * m


# --------------------------------- kernel ----------------------------------
def discriminator_kernel(x_ref, t1_ref, t2_ref, t3_ref, wf1_ref, vec_ref, out_ref):
    """One batch tile: x (bt, 128) bf16 -> sigmoid scores (1, bt) f32."""

    def mm_bias_relu(a_bf16, w_ref, bias_off, bias_len):
        acc = jnp.dot(a_bf16, w_ref[...], preferred_element_type=jnp.float32)
        acc = acc + vec_ref[:, bias_off:bias_off + bias_len]          # f32 bias add
        return jnp.maximum(acc, 0.0)                                  # f32 ReLU

    x = x_ref[...]                                                     # (bt, 128) bf16
    h1 = mm_bias_relu(x, t1_ref, _OFF_B1, _N1)                         # (bt, 256) f32
    h2 = mm_bias_relu(h1.astype(jnp.bfloat16), t2_ref, _OFF_B2, _N2)   # (bt, 384) f32
    h3 = mm_bias_relu(h2.astype(jnp.bfloat16), t3_ref, _OFF_B3, _N3)   # (bt, 640) f32
    f1 = mm_bias_relu(h3.astype(jnp.bfloat16), wf1_ref, _OFF_BF1, _FC1)  # (bt, 256) f32

    # fc2·fc3 folded offline into one 256-vector; contract against the transposed
    # activations so the result is already the lane-dense (1, bt) output row.
    w23 = vec_ref[:, _OFF_W23:_OFF_W23 + _FC1].astype(jnp.bfloat16)    # (1, 256)
    logits = jax.lax.dot_general(
        w23, f1.astype(jnp.bfloat16),
        dimension_numbers=(((1,), (1,)), ((), ())),
        preferred_element_type=jnp.float32)                            # (1, bt)
    b23 = vec_ref[:, _OFF_B23:_OFF_B23 + 1]                            # (1, 1)
    out_ref[...] = jax.nn.sigmoid(logits + b23)


# ------------------------------ parameters ---------------------------------
def init_params(key):
    """PyTorch-shaped parameters, deterministic uniform(-1/sqrt(fan_in), +...)."""
    ks = jax.random.split(key, 12)

    def u(k, shape, fan_in):
        bound = 1.0 / jnp.sqrt(float(fan_in))
        return jax.random.uniform(k, shape, jnp.float32, -bound, bound)

    w1 = u(ks[0], (8, 4, 3), 4 * 3);    b1 = u(ks[1], (8,), 4 * 3)
    w2 = u(ks[2], (16, 8, 3), 8 * 3);   b2 = u(ks[3], (16,), 8 * 3)
    w3 = u(ks[4], (32, 16, 3), 16 * 3); b3 = u(ks[5], (32,), 16 * 3)
    wf1 = u(ks[6], (256, 640), 640);    bf1 = u(ks[7], (256,), 640)
    wf2 = u(ks[8], (128, 256), 256);    bf2 = u(ks[9], (128,), 256)
    wf3 = u(ks[10], (1, 128), 128);     bf3 = u(ks[11], (1,), 128)
    return (w1, b1, w2, b2, w3, b3, wf1, bf1, wf2, bf2, wf3, bf3)


def prepack_params(params):
    """One-time repack of PyTorch-shaped params into kernel-ready operands."""
    (w1, b1, w2, b2, w3, b3, wf1, bf1, wf2, bf2, wf3, bf3) = (
        np.asarray(p, np.float32) for p in params)

    def conv_toeplitz(w, lin, rows_pad, cols_pad):
        # T[ci*lin + l + k, co*lout + l] = w[co, ci, k]   (valid conv, stride 1)
        cout, cin, kk = w.shape
        lout = lin - kk + 1
        t = np.zeros((rows_pad, cols_pad), np.float32)
        lo = np.arange(lout)
        for co in range(cout):
            for ci in range(cin):
                for k in range(kk):
                    t[ci * lin + lo + k, co * lout + lo] = w[co, ci, k]
        return t

    t1 = conv_toeplitz(w1, _L0, _K0, _N1)      # (128, 256)
    t2 = conv_toeplitz(w2, _L1, _N1, _N2)      # (256, 384)
    t3 = conv_toeplitz(w3, _L2, _N2, _N3)      # (384, 640)
    wf1t = wf1.T                               # (640, 256): flatten order matches c*20+l

    def conv_bias_flat(b, lout, pad_to):
        v = np.zeros((pad_to,), np.float32)
        v[:b.size * lout] = np.repeat(b, lout)
        return v

    # fc2/fc3 fused offline (no nonlinearity in between); contract in f64.
    w23 = (wf3.astype(np.float64) @ wf2.astype(np.float64)).reshape(-1)          # (256,)
    b23 = float((wf3.astype(np.float64) @ bf2.astype(np.float64)
                 + bf3.astype(np.float64))[0])

    vec = np.concatenate([
        conv_bias_flat(b1, _L1, _N1),
        conv_bias_flat(b2, _L2, _N2),
        conv_bias_flat(b3, _L3, _N3),
        bf1,
        w23.astype(np.float32),
        np.full((128,), b23, np.float32),
    ]).astype(np.float32).reshape(1, _VEC_LEN)

    bf16 = jnp.bfloat16
    return (jnp.asarray(t1, bf16), jnp.asarray(t2, bf16), jnp.asarray(t3, bf16),
            jnp.asarray(wf1t, bf16), jnp.asarray(vec, jnp.float32))


# -------------------------------- wrapper -----------------------------------
def _batch_tiling(batch):
    """Pick (tile, padded_batch).  Small batches: one sublane-aligned tile.
    Batches >= 256: tiles are multiples of 128 (lane-dense output blocks) and
    the grid has >= 2 steps so 'parallel' can shard over both v7x TensorCores."""
    b8 = _round_up(batch, 8)
    if b8 < _SPLIT_MIN_B:
        return b8, b8
    ntiles = max(2, pl.cdiv(b8, _BLOCK_B))
    bt = _round_up(pl.cdiv(b8, ntiles), 128)
    return bt, _round_up(b8, bt)


@jax.jit
def discriminator_forward(x_ncl, packed):
    """x_ncl: (B, 4, 26) float32 (PyTorch NCL layout). packed: prepack_params()."""
    t1, t2, t3, wf1t, vec = packed
    B = x_ncl.shape[0]
    bt, b_pad = _batch_tiling(B)
    grid = b_pad // bt

    # Lane-dense input: native NCL flatten (index = c*26 + l, no transpose),
    # padded 104 -> 128 lanes and B -> b_pad rows; bf16 is the MXU-input cast.
    x = x_ncl.reshape(B, _C0 * _L0).astype(jnp.bfloat16)
    x = jnp.pad(x, ((0, b_pad - B), (0, _K0 - _C0 * _L0)))

    weights = (t1, t2, t3, wf1t, vec)
    resident = [pl.BlockSpec(w.shape, lambda i: (0, 0)) for w in weights]

    flops_row = 2 * (_K0 * _N1 + _N1 * _N2 + _N2 * _N3 + _N3 * _FC1 + _FC1)
    bytes_w = sum(int(w.size) * w.dtype.itemsize for w in weights)
    cost = pl.CostEstimate(flops=b_pad * flops_row, transcendentals=b_pad,
                           bytes_accessed=bytes_w + int(x.size) * 2 + b_pad * 4)

    out = pl.pallas_call(
        discriminator_kernel,
        out_shape=jax.ShapeDtypeStruct((1, b_pad), jnp.float32),
        grid_spec=pltpu.PrefetchScalarGridSpec(
            num_scalar_prefetch=0,
            grid=(grid,),
            in_specs=[pl.BlockSpec((bt, _K0), lambda i: (i, 0))] + resident,
            out_specs=pl.BlockSpec((1, bt), lambda i: (0, i)),
        ),
        compiler_params=pltpu.CompilerParams(dimension_semantics=("parallel",)),
        cost_estimate=cost,
    )(x, *weights)

    return out.reshape(b_pad, 1)[:B]


# ------------------------------ f32 reference -------------------------------
def reference_forward(x_ncl, params):
    """Pure-JAX f32 reference matching the PyTorch module."""
    (w1, b1, w2, b2, w3, b3, wf1, bf1, wf2, bf2, wf3, bf3) = params

    def conv_relu(x, w, b):
        y = jax.lax.conv_general_dilated(
            x, w, window_strides=(1,), padding="VALID",
            dimension_numbers=("NCH", "OIH", "NCH"))
        return jax.nn.relu(y + b[None, :, None])

    h = conv_relu(x_ncl, w1, b1)
    h = conv_relu(h, w2, b2)
    h = conv_relu(h, w3, b3)
    h = h.reshape(h.shape[0], -1)            # channel-major flatten, like .view()
    h = jax.nn.relu(h @ wf1.T + bf1)
    h = h @ wf2.T + bf2
    h = h @ wf3.T + bf3
    return jax.nn.sigmoid(h)


if __name__ == "__main__":
    key = jax.random.PRNGKey(0)
    k_params, k_x1, k_x2 = jax.random.split(key, 3)

    params = init_params(k_params)
    packed = prepack_params(params)

    # (B, num_features=4, seq_len=26); second case exercises the multi-tile
    # (grid >= 2, lane-dense multi-block output) path.
    for B, kx in ((2, k_x1), (270, k_x2)):
        x = jax.random.normal(kx, (B, 4, 26), dtype=jnp.float32)
        out = jax.block_until_ready(discriminator_forward(x, packed))
        ref = reference_forward(x, params)

        assert out.shape == (B, 1)
        assert bool(jnp.all(jnp.isfinite(out)))
        assert bool(jnp.all((out >= 0.0) & (out <= 1.0)))
        err = float(jnp.max(jnp.abs(out - ref)))
        assert err < 5e-2, f"max |kernel - reference| = {err}"

    print("KERNEL_OK")
</pallas_src>

<mosaic_0001>
module attributes {stable_mosaic.version = 11 : i64} {
  func.func @discriminator_kernel(%arg0: i32, %arg1: memref<8x128xbf16, #tpu.memory_space<vmem>>, %arg2: memref<128x256xbf16, #tpu.memory_space<vmem>>, %arg3: memref<256x384xbf16, #tpu.memory_space<vmem>>, %arg4: memref<384x640xbf16, #tpu.memory_space<vmem>>, %arg5: memref<640x256xbf16, #tpu.memory_space<vmem>>, %arg6: memref<1x1920xf32, #tpu.memory_space<vmem>>, %arg7: memref<1x8xf32, #tpu.memory_space<vmem>>) attributes {dimension_semantics = [#tpu.dimension_semantics<parallel>], iteration_bounds = array<i64: 1>, scalar_prefetch = 0 : i64, scratch_operands = 0 : i64, tpu.core_type = #tpu.core_type<tc>, window_params = [{transform_indices = @transform_0, window_bounds = array<i64: 8, 128>}, {pipeline_mode = #tpu.pipeline_mode<synchronous>, transform_indices = @transform_1, window_bounds = array<i64: 128, 256>}, {pipeline_mode = #tpu.pipeline_mode<synchronous>, transform_indices = @transform_2, window_bounds = array<i64: 256, 384>}, {pipeline_mode = #tpu.pipeline_mode<synchronous>, transform_indices = @transform_3, window_bounds = array<i64: 384, 640>}, {pipeline_mode = #tpu.pipeline_mode<synchronous>, transform_indices = @transform_4, window_bounds = array<i64: 640, 256>}, {pipeline_mode = #tpu.pipeline_mode<synchronous>, transform_indices = @transform_5, window_bounds = array<i64: 1, 1920>}, {transform_indices = @transform_6, window_bounds = array<i64: 1, 8>}]} {
    %c0 = arith.constant 0 : index
    %c0_0 = arith.constant 0 : index
    %0 = vector.load %arg1[%c0, %c0_0] : memref<8x128xbf16, #tpu.memory_space<vmem>>, vector<8x128xbf16>
    %c0_1 = arith.constant 0 : index
    %c0_2 = arith.constant 0 : index
    %1 = vector.load %arg2[%c0_1, %c0_2] : memref<128x256xbf16, #tpu.memory_space<vmem>>, vector<128x256xbf16>
    %cst = arith.constant dense<0.000000e+00> : vector<8x256xf32>
    %2 = tpu.matmul %0, %1, %cst {dimension_numbers = #tpu.dot_dimension_numbers<[1], [0], [0], [1], [0, 0, 1, 1], [], []>} : vector<8x128xbf16>, vector<128x256xbf16>, vector<8x256xf32> -> vector<8x256xf32>
    %c0_3 = arith.constant 0 : index
    %c0_4 = arith.constant 0 : index
    %3 = vector.load %arg6[%c0_3, %c0_4] : memref<1x1920xf32, #tpu.memory_space<vmem>>, vector<1x256xf32>
    %4 = vector.broadcast %3 : vector<1x256xf32> to vector<8x256xf32>
    %5 = arith.addf %2, %4 : vector<8x256xf32>
    %cst_5 = arith.constant 0.000000e+00 : f32
    %6 = vector.broadcast %cst_5 : f32 to vector<8x256xf32>
    %7 = arith.maximumf %5, %6 : vector<8x256xf32>
    %8 = arith.truncf %7 : vector<8x256xf32> to vector<8x256xbf16>
    %c0_6 = arith.constant 0 : index
    %c0_7 = arith.constant 0 : index
    %9 = vector.load %arg3[%c0_6, %c0_7] : memref<256x384xbf16, #tpu.memory_space<vmem>>, vector<256x384xbf16>
    %cst_8 = arith.constant dense<0.000000e+00> : vector<8x384xf32>
    %10 = tpu.matmul %8, %9, %cst_8 {dimension_numbers = #tpu.dot_dimension_numbers<[1], [0], [0], [1], [0, 0, 1, 1], [], []>} : vector<8x256xbf16>, vector<256x384xbf16>, vector<8x384xf32> -> vector<8x384xf32>
    %c0_9 = arith.constant 0 : index
    %c256 = arith.constant 256 : index
    %11 = vector.load %arg6[%c0_9, %c256] : memref<1x1920xf32, #tpu.memory_space<vmem>>, vector<1x384xf32>
    %12 = vector.broadcast %11 : vector<1x384xf32> to vector<8x384xf32>
    %13 = arith.addf %10, %12 : vector<8x384xf32>
    %cst_10 = arith.constant 0.000000e+00 : f32
    %14 = vector.broadcast %cst_10 : f32 to vector<8x384xf32>
    %15 = arith.maximumf %13, %14 : vector<8x384xf32>
    %16 = arith.truncf %15 : vector<8x384xf32> to vector<8x384xbf16>
    %c0_11 = arith.constant 0 : index
    %c0_12 = arith.constant 0 : index
    %17 = vector.load %arg4[%c0_11, %c0_12] : memref<384x640xbf16, #tpu.memory_space<vmem>>, vector<384x640xbf16>
    %cst_13 = arith.constant dense<0.000000e+00> : vector<8x640xf32>
    %18 = tpu.matmul %16, %17, %cst_13 {dimension_numbers = #tpu.dot_dimension_numbers<[1], [0], [0], [1], [0, 0, 1, 1], [], []>} : vector<8x384xbf16>, vector<384x640xbf16>, vector<8x640xf32> -> vector<8x640xf32>
    %c0_14 = arith.constant 0 : index
    %c640 = arith.constant 640 : index
    %19 = vector.load %arg6[%c0_14, %c640] : memref<1x1920xf32, #tpu.memory_space<vmem>>, vector<1x640xf32>
    %20 = vector.broadcast %19 : vector<1x640xf32> to vector<8x640xf32>
    %21 = arith.addf %18, %20 : vector<8x640xf32>
    %cst_15 = arith.constant 0.000000e+00 : f32
    %22 = vector.broadcast %cst_15 : f32 to vector<8x640xf32>
    %23 = arith.maximumf %21, %22 : vector<8x640xf32>
    %24 = arith.truncf %23 : vector<8x640xf32> to vector<8x640xbf16>
    %c0_16 = arith.constant 0 : index
    %c0_17 = arith.constant 0 : index
    %25 = vector.load %arg5[%c0_16, %c0_17] : memref<640x256xbf16, #tpu.memory_space<vmem>>, vector<640x256xbf16>
    %cst_18 = arith.constant dense<0.000000e+00> : vector<8x256xf32>
    %26 = tpu.matmul %24, %25, %cst_18 {dimension_numbers = #tpu.dot_dimension_numbers<[1], [0], [0], [1], [0, 0, 1, 1], [], []>} : vector<8x640xbf16>, vector<640x256xbf16>, vector<8x256xf32> -> vector<8x256xf32>
    %c0_19 = arith.constant 0 : index
    %c1280 = arith.constant 1280 : index
    %27 = vector.load %arg6[%c0_19, %c1280] : memref<1x1920xf32, #tpu.memory_space<vmem>>, vector<1x256xf32>
    %28 = vector.broadcast %27 : vector<1x256xf32> to vector<8x256xf32>
    %29 = arith.addf %26, %28 : vector<8x256xf32>
    %cst_20 = arith.constant 0.000000e+00 : f32
    %30 = vector.broadcast %cst_20 : f32 to vector<8x256xf32>
    %31 = arith.maximumf %29, %30 : vector<8x256xf32>
    %c0_21 = arith.constant 0 : index
    %c1536 = arith.constant 1536 : index
    %32 = vector.load %arg6[%c0_21, %c1536] : memref<1x1920xf32, #tpu.memory_space<vmem>>, vector<1x256xf32>
    %33 = arith.truncf %32 : vector<1x256xf32> to vector<1x256xbf16>
    %34 = arith.truncf %31 : vector<8x256xf32> to vector<8x256xbf16>
    %cst_22 = arith.constant dense<0.000000e+00> : vector<1x8xf32>
    %35 = tpu.matmul %33, %34, %cst_22 {dimension_numbers = #tpu.dot_dimension_numbers<[1], [1], [0], [0], [0, 0, 1, 0], [], []>} : vector<1x256xbf16>, vector<8x256xbf16>, vector<1x8xf32> -> vector<1x8xf32>
    %c0_23 = arith.constant 0 : index
    %c1792 = arith.constant 1792 : index
    %36 = vector.load %arg6[%c0_23, %c1792] : memref<1x1920xf32, #tpu.memory_space<vmem>>, vector<1x1xf32>
    %37 = vector.broadcast %36 : vector<1x1xf32> to vector<1x8xf32>
    %38 = arith.addf %35, %37 : vector<1x8xf32>
    %39 = arith.negf %38 : vector<1x8xf32>
    %40 = math.exp %39 : vector<1x8xf32>
    %cst_24 = arith.constant 1.000000e+00 : f32
    %41 = vector.broadcast %cst_24 : f32 to vector<1x8xf32>
    %42 = arith.addf %41, %40 : vector<1x8xf32>
    %43 = arith.divf %41, %42 : vector<1x8xf32>
    %c0_25 = arith.constant 0 : index
    %c0_26 = arith.constant 0 : index
    %44 = vector.load %arg7[%c0_25, %c0_26] : memref<1x8xf32, #tpu.memory_space<vmem>>, vector<1x8xf32>
    tpu.vector_store %arg7[%c0_25, %c0_26], %43 {strides = array<i32>} : memref<1x8xf32, #tpu.memory_space<vmem>>, vector<1x8xf32>,
    return
  }
  func.func @transform_0(%arg0: i32) -> (i32, i32) {
    %c0_i32 = arith.constant 0 : i32
    %c0_i32_0 = arith.constant 0 : i32
    return %arg0, %c0_i32 : i32, i32
  }
  func.func @transform_1(%arg0: i32) -> (i32, i32) {
    %c0_i32 = arith.constant 0 : i32
    %c0_i32_0 = arith.constant 0 : i32
    %c0_i32_1 = arith.constant 0 : i32
    return %c0_i32, %c0_i32_0 : i32, i32
  }
  func.func @transform_2(%arg0: i32) -> (i32, i32) {
    %c0_i32 = arith.constant 0 : i32
    %c0_i32_0 = arith.constant 0 : i32
    %c0_i32_1 = arith.constant 0 : i32
    return %c0_i32, %c0_i32_0 : i32, i32
  }
  func.func @transform_3(%arg0: i32) -> (i32, i32) {
    %c0_i32 = arith.constant 0 : i32
    %c0_i32_0 = arith.constant 0 : i32
    %c0_i32_1 = arith.constant 0 : i32
    return %c0_i32, %c0_i32_0 : i32, i32
  }
  func.func @transform_4(%arg0: i32) -> (i32, i32) {
    %c0_i32 = arith.constant 0 : i32
    %c0_i32_0 = arith.constant 0 : i32
    %c0_i32_1 = arith.constant 0 : i32
    return %c0_i32, %c0_i32_0 : i32, i32
  }
  func.func @transform_5(%arg0: i32) -> (i32, i32) {
    %c0_i32 = arith.constant 0 : i32
    %c0_i32_0 = arith.constant 0 : i32
    %c0_i32_1 = arith.constant 0 : i32
    return %c0_i32, %c0_i32_0 : i32, i32
  }
  func.func @transform_6(%arg0: i32) -> (i32, i32) {
    %c0_i32 = arith.constant 0 : i32
    %c0_i32_0 = arith.constant 0 : i32
    return %c0_i32, %arg0 : i32, i32
  }
}

</mosaic_0001>

<llo_original>
// kernel: discriminator_forward.1
$region0: #{discriminator_forward.1}
  #allocation0 [shape = 'u32[]', space=smem, size = 0x4, offset = 0x4, fixed_abs, tag = 'smem constant byte address 0x4 - core index']
  #allocation1 [shape = 'u32[144,128]{1,0:T(1,128)}', space=vmem, size = 0x12000, scoped, tag = 'internal scratch']
  %s0 = inlined_call_operand.vmem [shape: bf16[8,128], index: 0, kind: input, shape index: {}]
  %s1 = inlined_call_operand.hbm [shape: bf16[128,256], index: 1, kind: input, shape index: {}]
  %s2 = inlined_call_operand.hbm [shape: bf16[256,384], index: 2, kind: input, shape index: {}]
  %s3 = inlined_call_operand.hbm [shape: bf16[384,640], index: 3, kind: input, shape index: {}]
  %s4 = inlined_call_operand.hbm [shape: bf16[640,256], index: 4, kind: input, shape index: {}]
  %s5 = inlined_call_operand.vmem [shape: f32[1,1920], index: 5, kind: input, shape index: {}]
  %s6 = inlined_call_operand.vmem [shape: f32[1,8], index: 6, kind: output, shape index: {}]
  %s7 = sld [smem:[#allocation0]]
  $region50: #{discriminator_forward.1} parent=0
    _
  %s9 = ssub.s32 1, %s7
  %s10 = scalar_select 0, %s9, %s7
  $region1: #{discriminator_forward.1} parent=0
    #allocation2 [shape = 'u8[65536]{0}', space=vmem, size = 0x10000, scoped, tag = 'input window, operand 1, single buffered']
    #allocation3 [shape = 's32[1]{0}', space=sflag, size = 0x4, scoped, tag = 'scoped memory for discriminator_forward.1']
    #allocation4 [shape = 'u8[196608]{0}', space=vmem, size = 0x30000, scoped, tag = 'input window, operand 2, single buffered']
    #allocation5 [shape = 's32[1]{0}', space=sflag, size = 0x4, scoped, tag = 'scoped memory for discriminator_forward.1']
    #allocation6 [shape = 'u8[491520]{0}', space=vmem, size = 0x78000, scoped, tag = 'input window, operand 3, single buffered']
    #allocation7 [shape = 'u8[327680]{0}', space=vmem, size = 0x50000, scoped, tag = 'input window, operand 4, single buffered']
    #allocation8 [shape = 's32[1]{0}', space=sflag, size = 0x4, scoped, tag = 'scoped memory for discriminator_forward.1']
    %11 = vsyncpa [#allocation3], 0
    %12 = vsyncpa [#allocation5], 0
    %13 = vsyncpa [#allocation8], 0
    // Predicated region
    $region2: #{discriminator_forward.1} parent=1 // pred_check
      _
    $region3: #{discriminator_forward.1} parent=1 // pred_check_branch
      %15 = sbr.rel (0) target = $region5
    $region4: #{discriminator_forward.1} parent=1 // pred_region
      _
    $region5: #{discriminator_forward.1} parent=1 // pred_fallthru
      _
    // Predicated region
    $region6: #{discriminator_forward.1} parent=1 // pred_check
      _
    $region7: #{discriminator_forward.1} parent=1 // pred_check_branch
      %17 = sbr.rel (0) target = $region9
    $region8: #{discriminator_forward.1} parent=1 // pred_region
      %s19 = ssub.s32 2048, 2048
      %20 = vsyncadd [#allocation3], %s19
      %s21 = sshll.u32 [#allocation2], 4
      %s22 = int_to_ptr.vmem [resolvable:$true] %s21
      %27 = dma.hbm_to_vmem [thread:$0]  %s1, 2048, %s22, [#allocation3], 128, 128, 8
    $region9: #{discriminator_forward.1} parent=1 // pred_fallthru
      _
    // Predicated region
    $region10: #{discriminator_forward.1} parent=1 // pred_check
      _
    $region11: #{discriminator_forward.1} parent=1 // pred_check_branch
      %29 = sbr.rel (0) target = $region13
    $region12: #{discriminator_forward.1} parent=1 // pred_region
      %s31 = ssub.s32 6144, 6144
      %32 = vsyncadd [#allocation5], %s31
      %s33 = sshll.u32 [#allocation4], 4
      %s34 = int_to_ptr.vmem [resolvable:$true] %s33
      %39 = dma.hbm_to_vmem [thread:$0]  %s2, 6144, %s34, [#allocation5], 192, 192, 12
    $region13: #{discriminator_forward.1} parent=1 // pred_fallthru
      _
    // Predicated region
    $region14: #{discriminator_forward.1} parent=1 // pred_check
      _
    $region15: #{discriminator_forward.1} parent=1 // pred_check_branch
      %41 = sbr.rel (0) target = $region17
    $region16: #{discriminator_forward.1} parent=1 // pred_region
      %s43 = ssub.s32 15360, 15360
      %44 = vsyncadd [#allocation5], %s43
      %s45 = sshll.u32 [#allocation6], 4
      %s46 = int_to_ptr.vmem [resolvable:$true] %s45
      %51 = dma.hbm_to_vmem [thread:$0]  %s3, 15360, %s46, [#allocation5], 320, 320, 20
    $region17: #{discriminator_forward.1} parent=1 // pred_fallthru
      _
    // Predicated region
    $region18: #{discriminator_forward.1} parent=1 // pred_check
      _
    $region19: #{discriminator_forward.1} parent=1 // pred_check_branch
      %53 = sbr.rel (0) target = $region21
    $region20: #{discriminator_forward.1} parent=1 // pred_region
      %s55 = ssub.s32 10240, 10240
      %56 = vsyncadd [#allocation8], %s55
      %s57 = sshll.u32 [#allocation7], 4
      %s58 = int_to_ptr.vmem [resolvable:$true] %s57
      %63 = dma.hbm_to_vmem [thread:$0]  %s4, 10240, %s58, [#allocation8], 128, 128, 8
    $region21: #{discriminator_forward.1} parent=1 // pred_fallthru
      _
    // Predicated region
    $region22: #{discriminator_forward.1} parent=1 // pred_check
      _
    $region23: #{discriminator_forward.1} parent=1 // pred_check_branch
      %65 = sbr.rel (0) target = $region25
    $region24: #{discriminator_forward.1} parent=1 // pred_region
      _
    $region25: #{discriminator_forward.1} parent=1 // pred_fallthru
      _
    // Predicated region
    $region26: #{discriminator_forward.1} parent=1 // pred_check
      _
    $region27: #{discriminator_forward.1} parent=1 // pred_check_branch
      %67 = sbr.rel (0) target = $region29
    $region28: #{discriminator_forward.1} parent=1 // pred_region
      %68 = dma.done [#allocation3], 2048
    $region29: #{discriminator_forward.1} parent=1 // pred_fallthru
      _
    // Predicated region
    $region30: #{discriminator_forward.1} parent=1 // pred_check
      _
    $region31: #{discriminator_forward.1} parent=1 // pred_check_branch
      %70 = sbr.rel (0) target = $region33
    $region32: #{discriminator_forward.1} parent=1 // pred_region
      %71 = dma.done [#allocation5], 6144
    $region33: #{discriminator_forward.1} parent=1 // pred_fallthru
      _
    // Predicated region
    $region34: #{discriminator_forward.1} parent=1 // pred_check
      _
    $region35: #{discriminator_forward.1} parent=1 // pred_check_branch
      %73 = sbr.rel (0) target = $region37
    $region36: #{discriminator_forward.1} parent=1 // pred_region
      %74 = dma.done [#allocation5], 15360
    $region37: #{discriminator_forward.1} parent=1 // pred_fallthru
      _
    // Predicated region
    $region38: #{discriminator_forward.1} parent=1 // pred_check
      _
    $region39: #{discriminator_forward.1} parent=1 // pred_check_branch
      %76 = sbr.rel (0) target = $region41
    $region40: #{discriminator_forward.1} parent=1 // pred_region
      %77 = dma.done [#allocation8], 10240
    $region41: #{discriminator_forward.1} parent=1 // pred_fallthru
      _
    %v79 = vld [vmem:[%s0] sm:$0xf]
    %v80 = vld [vmem:[#allocation2] sm:$0xff]
    %v81 = vld [vmem:[#allocation2 + $0x8] sm:$0xff]
    %v82 = vld [vmem:[#allocation2 + $0x10] sm:$0xff]
    %v83 = vld [vmem:[#allocation2 + $0x18] sm:$0xff]
    %v84 = vld [vmem:[#allocation2 + $0x20] sm:$0xff]
    %v85 = vld [vmem:[#allocation2 + $0x28] sm:$0xff]
    %v86 = vld [vmem:[#allocation2 + $0x30] sm:$0xff]
    %v87 = vld [vmem:[#allocation2 + $0x38] sm:$0xff]
    %v88 = vld [vmem:[#allocation2 + $0x40] sm:$0xff]
    %v89 = vld [vmem:[#allocation2 + $0x48] sm:$0xff]
    %v90 = vld [vmem:[#allocation2 + $0x50] sm:$0xff]
    %v91 = vld [vmem:[#allocation2 + $0x58] sm:$0xff]
    %v92 = vld [vmem:[#allocation2 + $0x60] sm:$0xff]
    %v93 = vld [vmem:[#allocation2 + $0x68] sm:$0xff]
    %v94 = vld [vmem:[#allocation2 + $0x70] sm:$0xff]
    %v95 = vld [vmem:[#allocation2 + $0x78] sm:$0xff]
    %v96 = vld [vmem:[%s5] sm:$0x3]
    %v98 = vlaneseq
    %v99 = vshrl.u32 %v98, 7
    %v100 = vsub.s32 0, %v99
    %v101 = vrot.slane %v96, %v100
    %v102 = vlaneseq
    %v103 = vshrl.u32 %v102, 7
    %v104 = vsub.s32 1, %v103
    %v105 = vrot.slane %v96, %v104
    %v124 = vunpack.c.l.b16 %v80
    %v125 = vunpack.c.h.b16 %v80
    %v126 = vunpack.c.l.b16 %v81
    %v127 = vunpack.c.h.b16 %v81
    %v128 = vunpack.c.l.b16 %v82
    %v129 = vunpack.c.h.b16 %v82
    %v130 = vunpack.c.l.b16 %v83
    %v131 = vunpack.c.h.b16 %v83
    %v132 = vunpack.c.l.b16 %v84
    %v133 = vunpack.c.h.b16 %v84
    %v134 = vunpack.c.l.b16 %v85
    %v135 = vunpack.c.h.b16 %v85
    %v136 = vunpack.c.l.b16 %v86
    %v137 = vunpack.c.h.b16 %v86
    %v138 = vunpack.c.l.b16 %v87
    %v139 = vunpack.c.h.b16 %v87
    %v140 = vunpack.c.l.b16 %v88
    %v141 = vunpack.c.h.b16 %v88
    %v142 = vunpack.c.l.b16 %v89
    %v143 = vunpack.c.h.b16 %v89
    %v144 = vunpack.c.l.b16 %v90
    %v145 = vunpack.c.h.b16 %v90
    %v146 = vunpack.c.l.b16 %v91
    %v147 = vunpack.c.h.b16 %v91
    %v148 = vunpack.c.l.b16 %v92
    %v149 = vunpack.c.h.b16 %v92
    %v150 = vunpack.c.l.b16 %v93
    %v151 = vunpack.c.h.b16 %v93
    %v152 = vunpack.c.l.b16 %v94
    %v153 = vunpack.c.h.b16 %v94
    %v154 = vunpack.c.l.b16 %v95
    %v155 = vunpack.c.h.b16 %v95
    %v156 = vpack.c.b16 %v126, %v124
    %v157 = vpack.c.b16 %v127, %v125
    %v158 = vpack.c.b16 %v130, %v128
    %v159 = vpack.c.b16 %v131, %v129
    %v160 = vpack.c.b16 %v134, %v132
    %v161 = vpack.c.b16 %v135, %v133
    %v162 = vpack.c.b16 %v138, %v136
    %v163 = vpack.c.b16 %v139, %v137
    %v164 = vpack.c.b16 %v142, %v140
    %v165 = vpack.c.b16 %v143, %v141
    %v166 = vpack.c.b16 %v146, %v144
    %v167 = vpack.c.b16 %v147, %v145
    %v168 = vpack.c.b16 %v150, %v148
    %v169 = vpack.c.b16 %v151, %v149
    %v170 = vpack.c.b16 %v154, %v152
    %v171 = vpack.c.b16 %v155, %v153
    %188 = vmatprep.subr.bf16.mxu0 %v171
    %189 = vmatpush1.bf16.msra.mxu0 %v170
    %190 = vmatprep.subr.bf16.mxu0 %v169
    %191 = vmatpush1.bf16.msra.mxu0 %v168
    %192 = vmatprep.subr.bf16.mxu0 %v167
    %193 = vmatpush1.bf16.msra.mxu0 %v166
    %194 = vmatprep.subr.bf16.mxu0 %v165
    %195 = vmatpush1.bf16.msra.mxu0 %v164
    %196 = vmatprep.subr.bf16.mxu0 %v163
    %197 = vmatpush1.bf16.msra.mxu0 %v162
    %198 = vmatprep.subr.bf16.mxu0 %v161
    %199 = vmatpush1.bf16.msra.mxu0 %v160
    %200 = vmatprep.subr.bf16.mxu0 %v159
    %201 = vmatpush1.bf16.msra.mxu0 %v158
    %202 = vmatprep.subr.bf16.mxu0 %v157
    %203 = vmatpush1.bf16.msra.mxu0 %v156
    %204 = vmatprep.subr.bf16.mxu0 0
    %205 = vmatpush2.bf16.msra.mxu0 0
    %206 = vmatprep.subr.bf16.mxu0 0
    %207 = vmatpush2.bf16.msra.mxu0 0
    %208 = vmatprep.subr.bf16.mxu0 0
    %209 = vmatpush2.bf16.msra.mxu0 0
    %210 = vmatprep.subr.bf16.mxu0 0
    %211 = vmatpush2.bf16.msra.mxu0 0
    %212 = vmatprep.subr.bf16.mxu0 0
    %213 = vmatpush2.bf16.msra.mxu0 0
    %214 = vmatprep.subr.bf16.mxu0 0
    %215 = vmatpush2.bf16.msra.mxu0 0
    %216 = vmatprep.subr.bf16.mxu0 0
    %217 = vmatpush2.bf16.msra.mxu0 0
    %218 = vmatprep.subr.bf16.mxu0 0
    %219 = vmatpush2.bf16.msra.mxu0 0
    %220 = vmatprep.mubr.bf16.mxu0 0
    %221 = vmatmul.mubr.bf16.gmra.mxu0 %v79
    %v222 = vpop.f32.mrf.mxu0
    %v223 = vadd.f32 %v101, %v222
    %v224 = vpop.f32.mrf.mxu0
    %v225 = vadd.f32 %v105, %v224
    %v226 = vpop.f32.mrf.mxu0
    %v227 = vpop.f32.mrf.mxu0
    %228 = vdwg.mxu0
    %v229 = vmax.f32 %v223, 0.0
    %v230 = vmax.f32 %v225, 0.0
    %v231 = vpack.c.bf16 %v229, %v229
    %v232 = vpack.c.bf16 %v230, %v230
    %v233 = vld [vmem:[#allocation4] sm:$0xff]
    %v234 = vld [vmem:[#allocation4 + $0x8] sm:$0xf]
    %v235 = vld [vmem:[#allocation4 + $0xc] sm:$0xff]
    %v236 = vld [vmem:[#allocation4 + $0x14] sm:$0xf]
    %v237 = vld [vmem:[#allocation4 + $0x18] sm:$0xff]
    %v238 = vld [vmem:[#allocation4 + $0x20] sm:$0xf]
    %v239 = vld [vmem:[#allocation4 + $0x24] sm:$0xff]
    %v240 = vld [vmem:[#allocation4 + $0x2c] sm:$0xf]
    %v241 = vld [vmem:[#allocation4 + $0x30] sm:$0xff]
    %v242 = vld [vmem:[#allocation4 + $0x38] sm:$0xf]
    %v243 = vld [vmem:[#allocation4 + $0x3c] sm:$0xff]
    %v244 = vld [vmem:[#allocation4 + $0x44] sm:$0xf]
    %v245 = vld [vmem:[#allocation4 + $0x48] sm:$0xff]
    %v246 = vld [vmem:[#allocation4 + $0x50] sm:$0xf]
    %v247 = vld [vmem:[#allocation4 + $0x54] sm:$0xff]
    %v248 = vld [vmem:[#allocation4 + $0x5c] sm:$0xf]
    %v249 = vld [vmem:[#allocation4 + $0x60] sm:$0xff]
    %v250 = vld [vmem:[#allocation4 + $0x68] sm:$0xf]
    %v251 = vld [vmem:[#allocation4 + $0x6c] sm:$0xff]
    %v252 = vld [vmem:[#allocation4 + $0x74] sm:$0xf]
    %v253 = vld [vmem:[#allocation4 + $0x78] sm:$0xff]
    %v254 = vld [vmem:[#allocation4 + $0x80] sm:$0xf]
    %v255 = vld [vmem:[#allocation4 + $0x84] sm:$0xff]
    %v256 = vld [vmem:[#allocation4 + $0x8c] sm:$0xf]
    %v257 = vld [vmem:[#allocation4 + $0x90] sm:$0xff]
    %v258 = vld [vmem:[#allocation4 + $0x98] sm:$0xf]
    %v259 = vld [vmem:[#allocation4 + $0x9c] sm:$0xff]
    %v260 = vld [vmem:[#allocation4 + $0xa4] sm:$0xf]
    %v261 = vld [vmem:[#allocation4 + $0xa8] sm:$0xff]
    %v262 = vld [vmem:[#allocation4 + $0xb0] sm:$0xf]
    %v263 = vld [vmem:[#allocation4 + $0xb4] sm:$0xff]
    %v264 = vld [vmem:[#allocation4 + $0xbc] sm:$0xf]
    %v265 = vld [vmem:[#allocation4 + $0xc0] sm:$0xff]
    %v266 = vld [vmem:[#allocation4 + $0xc8] sm:$0xf]
    %v267 = vld [vmem:[#allocation4 + $0xcc] sm:$0xff]
    %v268 = vld [vmem:[#allocation4 + $0xd4] sm:$0xf]
    %v269 = vld [vmem:[#allocation4 + $0xd8] sm:$0xff]
    %v270 = vld [vmem:[#allocation4 + $0xe0] sm:$0xf]
    %v271 = vld [vmem:[#allocation4 + $0xe4] sm:$0xff]
    %v272 = vld [vmem:[#allocation4 + $0xec] sm:$0xf]
    %v273 = vld [vmem:[#allocation4 + $0xf0] sm:$0xff]
    %v274 = vld [vmem:[#allocation4 + $0xf8] sm:$0xf]
    %v275 = vld [vmem:[#allocation4 + $0xfc] sm:$0xff]
    %v276 = vld [vmem:[#allocation4 + $0x104] sm:$0xf]
    %v277 = vld [vmem:[#allocation4 + $0x108] sm:$0xff]
    %v278 = vld [vmem:[#allocation4 + $0x110] sm:$0xf]
    %v279 = vld [vmem:[#allocation4 + $0x114] sm:$0xff]
    %v280 = vld [vmem:[#allocation4 + $0x11c] sm:$0xf]
    %v281 = vld [vmem:[#allocation4 + $0x120] sm:$0xff]
    %v282 = vld [vmem:[#allocation4 + $0x128] sm:$0xf]
    %v283 = vld [vmem:[#allocation4 + $0x12c] sm:$0xff]
    %v284 = vld [vmem:[#allocation4 + $0x134] sm:$0xf]
    %v285 = vld [vmem:[#allocation4 + $0x138] sm:$0xff]
    %v286 = vld [vmem:[#allocation4 + $0x140] sm:$0xf]
    %v287 = vld [vmem:[#allocation4 + $0x144] sm:$0xff]
    %v288 = vld [vmem:[#allocation4 + $0x14c] sm:$0xf]
    %v289 = vld [vmem:[#allocation4 + $0x150] sm:$0xff]
    %v290 = vld [vmem:[#allocation4 + $0x158] sm:$0xf]
    %v291 = vld [vmem:[#allocation4 + $0x15c] sm:$0xff]
    %v292 = vld [vmem:[#allocation4 + $0x164] sm:$0xf]
    %v293 = vld [vmem:[#allocation4 + $0x168] sm:$0xff]
    %v294 = vld [vmem:[#allocation4 + $0x170] sm:$0xf]
    %v295 = vld [vmem:[#allocation4 + $0x174] sm:$0xff]
    %v296 = vld [vmem:[#allocation4 + $0x17c] sm:$0xf]
    %v297 = vld [vmem:[%s5 + $0x2] sm:$0x7]
    %v299 = vlaneseq
    %v300 = vshrl.u32 %v299, 7
    %v301 = vsub.s32 0, %v300
    %v302 = vrot.slane %v297, %v301
    %v303 = vlaneseq
    %v304 = vshrl.u32 %v303, 7
    %v305 = vsub.s32 1, %v304
    %v306 = vrot.slane %v297, %v305
    %v307 = vlaneseq
    %v308 = vshrl.u32 %v307, 7
    %v309 = vsub.s32 2, %v308
    %v310 = vrot.slane %v297, %v309
    %v378 = vunpack.c.l.b16 %v233
    %v379 = vunpack.c.h.b16 %v233
    %v380 = vunpack.c.l.b16 %v234
    %v381 = vunpack.c.l.b16 %v235
    %v382 = vunpack.c.h.b16 %v235
    %v383 = vunpack.c.l.b16 %v236
    %v384 = vunpack.c.l.b16 %v237
    %v385 = vunpack.c.h.b16 %v237
    %v386 = vunpack.c.l.b16 %v238
    %v387 = vunpack.c.l.b16 %v239
    %v388 = vunpack.c.h.b16 %v239
    %v389 = vunpack.c.l.b16 %v240
    %v390 = vunpack.c.l.b16 %v241
    %v391 = vunpack.c.h.b16 %v241
    %v392 = vunpack.c.l.b16 %v242
    %v393 = vunpack.c.l.b16 %v243
    %v394 = vunpack.c.h.b16 %v243
    %v395 = vunpack.c.l.b16 %v244
    %v396 = vunpack.c.l.b16 %v245
    %v397 = vunpack.c.h.b16 %v245
    %v398 = vunpack.c.l.b16 %v246
    %v399 = vunpack.c.l.b16 %v247
    %v400 = vunpack.c.h.b16 %v247
    %v401 = vunpack.c.l.b16 %v248
    %v402 = vunpack.c.l.b16 %v249
    %v403 = vunpack.c.h.b16 %v249
    %v404 = vunpack.c.l.b16 %v250
    %v405 = vunpack.c.l.b16 %v251
    %v406 = vunpack.c.h.b16 %v251
    %v407 = vunpack.c.l.b16 %v252
    %v408 = vunpack.c.l.b16 %v253
    %v409 = vunpack.c.h.b16 %v253
    %v410 = vunpack.c.l.b16 %v254
    %v411 = vunpack.c.l.b16 %v255
    %v412 = vunpack.c.h.b16 %v255
    %v413 = vunpack.c.l.b16 %v256
    %v414 = vunpack.c.l.b16 %v257
    %v415 = vunpack.c.h.b16 %v257
    %v416 = vunpack.c.l.b16 %v258
    %v417 = vunpack.c.l.b16 %v259
    %v418 = vunpack.c.h.b16 %v259
    %v419 = vunpack.c.l.b16 %v260
    %v420 = vunpack.c.l.b16 %v261
    %v421 = vunpack.c.h.b16 %v261
    %v422 = vunpack.c.l.b16 %v262
    %v423 = vunpack.c.l.b16 %v263
    %v424 = vunpack.c.h.b16 %v263
    %v425 = vunpack.c.l.b16 %v264
    %v426 = vunpack.c.l.b16 %v265
    %v427 = vunpack.c.h.b16 %v265
    %v428 = vunpack.c.l.b16 %v266
    %v429 = vunpack.c.l.b16 %v267
    %v430 = vunpack.c.h.b16 %v267
    %v431 = vunpack.c.l.b16 %v268
    %v432 = vunpack.c.l.b16 %v269
    %v433 = vunpack.c.h.b16 %v269
    %v434 = vunpack.c.l.b16 %v270
    %v435 = vunpack.c.l.b16 %v271
    %v436 = vunpack.c.h.b16 %v271
    %v437 = vunpack.c.l.b16 %v272
    %v438 = vunpack.c.l.b16 %v273
    %v439 = vunpack.c.h.b16 %v273
    %v440 = vunpack.c.l.b16 %v274
    %v441 = vunpack.c.l.b16 %v275
    %v442 = vunpack.c.h.b16 %v275
    %v443 = vunpack.c.l.b16 %v276
    %v444 = vunpack.c.l.b16 %v277
    %v445 = vunpack.c.h.b16 %v277
    %v446 = vunpack.c.l.b16 %v278
    %v447 = vunpack.c.l.b16 %v279
    %v448 = vunpack.c.h.b16 %v279
    %v449 = vunpack.c.l.b16 %v280
    %v450 = vunpack.c.l.b16 %v281
    %v451 = vunpack.c.h.b16 %v281
    %v452 = vunpack.c.l.b16 %v282
    %v453 = vunpack.c.l.b16 %v283
    %v454 = vunpack.c.h.b16 %v283
    %v455 = vunpack.c.l.b16 %v284
    %v456 = vunpack.c.l.b16 %v285
    %v457 = vunpack.c.h.b16 %v285
    %v458 = vunpack.c.l.b16 %v286
    %v459 = vunpack.c.l.b16 %v287
    %v460 = vunpack.c.h.b16 %v287
    %v461 = vunpack.c.l.b16 %v288
    %v462 = vunpack.c.l.b16 %v289
    %v463 = vunpack.c.h.b16 %v289
    %v464 = vunpack.c.l.b16 %v290
    %v465 = vunpack.c.l.b16 %v291
    %v466 = vunpack.c.h.b16 %v291
    %v467 = vunpack.c.l.b16 %v292
    %v468 = vunpack.c.l.b16 %v293
    %v469 = vunpack.c.h.b16 %v293
    %v470 = vunpack.c.l.b16 %v294
    %v471 = vunpack.c.l.b16 %v295
    %v472 = vunpack.c.h.b16 %v295
    %v473 = vunpack.c.l.b16 %v296
    %v474 = vpack.c.b16 %v381, %v378
    %v475 = vpack.c.b16 %v382, %v379
    %v476 = vpack.c.b16 %v383, %v380
    %v477 = vpack.c.b16 %v387, %v384
    %v478 = vpack.c.b16 %v388, %v385
    %v479 = vpack.c.b16 %v389, %v386
    %v480 = vpack.c.b16 %v393, %v390
    %v481 = vpack.c.b16 %v394, %v391
    %v482 = vpack.c.b16 %v395, %v392
    %v483 = vpack.c.b16 %v399, %v396
    %v484 = vpack.c.b16 %v400, %v397
    %v485 = vpack.c.b16 %v401, %v398
    %v486 = vpack.c.b16 %v405, %v402
    %v487 = vpack.c.b16 %v406, %v403
    %v488 = vpack.c.b16 %v407, %v404
    %v489 = vpack.c.b16 %v411, %v408
    %v490 = vpack.c.b16 %v412, %v409
    %v491 = vpack.c.b16 %v413, %v410
    %v492 = vpack.c.b16 %v417, %v414
    %v493 = vpack.c.b16 %v418, %v415
    %v494 = vpack.c.b16 %v419, %v416
    %v495 = vpack.c.b16 %v423, %v420
    %v496 = vpack.c.b16 %v424, %v421
    %v497 = vpack.c.b16 %v425, %v422
    %v498 = vpack.c.b16 %v429, %v426
    %v499 = vpack.c.b16 %v430, %v427
    %v500 = vpack.c.b16 %v431, %v428
    %v501 = vpack.c.b16 %v435, %v432
    %v502 = vpack.c.b16 %v436, %v433
    %v503 = vpack.c.b16 %v437, %v434
    %v504 = vpack.c.b16 %v441, %v438
    %v505 = vpack.c.b16 %v442, %v439
    %v506 = vpack.c.b16 %v443, %v440
    %v507 = vpack.c.b16 %v447, %v444
    %v508 = vpack.c.b16 %v448, %v445
    %v509 = vpack.c.b16 %v449, %v446
    %v510 = vpack.c.b16 %v453, %v450
    %v511 = vpack.c.b16 %v454, %v451
    %v512 = vpack.c.b16 %v455, %v452
    %v513 = vpack.c.b16 %v459, %v456
    %v514 = vpack.c.b16 %v460, %v457
    %v515 = vpack.c.b16 %v461, %v458
    %v516 = vpack.c.b16 %v465, %v462
    %v517 = vpack.c.b16 %v466, %v463
    %v518 = vpack.c.b16 %v467, %v464
    %v519 = vpack.c.b16 %v471, %v468
    %v520 = vpack.c.b16 %v472, %v469
    %v521 = vpack.c.b16 %v473, %v470
    %570 = vmatprep.subr.bf16.mxu0 %v496
    %571 = vmatpush1.bf16.msra.mxu0 %v495
    %572 = vmatprep.subr.bf16.mxu0 %v493
    %573 = vmatpush1.bf16.msra.mxu0 %v492
    %574 = vmatprep.subr.bf16.mxu0 %v490
    %575 = vmatpush1.bf16.msra.mxu0 %v489
    %576 = vmatprep.subr.bf16.mxu0 %v487
    %577 = vmatpush1.bf16.msra.mxu0 %v486
    %578 = vmatprep.subr.bf16.mxu0 %v484
    %579 = vmatpush1.bf16.msra.mxu0 %v483
    %580 = vmatprep.subr.bf16.mxu0 %v481
    %581 = vmatpush1.bf16.msra.mxu0 %v480
    %582 = vmatprep.subr.bf16.mxu0 %v478
    %583 = vmatpush1.bf16.msra.mxu0 %v477
    %584 = vmatprep.subr.bf16.mxu0 %v475
    %585 = vmatpush1.bf16.msra.mxu0 %v474
    %586 = vmatprep.subr.bf16.mxu0 %v520
    %587 = vmatpush2.bf16.msra.mxu0 %v519
    %588 = vmatprep.subr.bf16.mxu0 %v517
    %589 = vmatpush2.bf16.msra.mxu0 %v516
    %590 = vmatprep.subr.bf16.mxu0 %v514
    %591 = vmatpush2.bf16.msra.mxu0 %v513
    %592 = vmatprep.subr.bf16.mxu0 %v511
    %593 = vmatpush2.bf16.msra.mxu0 %v510
    %594 = vmatprep.subr.bf16.mxu0 %v508
    %595 = vmatpush2.bf16.msra.mxu0 %v507
    %596 = vmatprep.subr.bf16.mxu0 %v505
    %597 = vmatpush2.bf16.msra.mxu0 %v504
    %598 = vmatprep.subr.bf16.mxu0 %v502
    %599 = vmatpush2.bf16.msra.mxu0 %v501
    %600 = vmatprep.subr.bf16.mxu0 %v499
    %601 = vmatpush2.bf16.msra.mxu0 %v498
    %602 = vmatprep.mubr.bf16.mxu0 %v232
    %603 = vmatmul.mubr.bf16.gmra.mxu0 %v231
    %v604 = vpop.f32.mrf.mxu0
    %v605 = vadd.f32 %v302, %v604
    %v606 = vpop.f32.mrf.mxu0
    %v607 = vadd.f32 %v306, %v606
    %v608 = vpop.f32.mrf.mxu0
    %v609 = vpop.f32.mrf.mxu0
    %610 = vdwg.mxu0
    %611 = vmatprep.subr.bf16.mxu0 0
    %612 = vmatpush1.bf16.msra.mxu0 %v497
    %613 = vmatprep.subr.bf16.mxu0 0
    %614 = vmatpush1.bf16.msra.mxu0 %v494
    %615 = vmatprep.subr.bf16.mxu0 0
    %616 = vmatpush1.bf16.msra.mxu0 %v491
    %617 = vmatprep.subr.bf16.mxu0 0
    %618 = vmatpush1.bf16.msra.mxu0 %v488
    %619 = vmatprep.subr.bf16.mxu0 0
    %620 = vmatpush1.bf16.msra.mxu0 %v485
    %621 = vmatprep.subr.bf16.mxu0 0
    %622 = vmatpush1.bf16.msra.mxu0 %v482
    %623 = vmatprep.subr.bf16.mxu0 0
    %624 = vmatpush1.bf16.msra.mxu0 %v479
    %625 = vmatprep.subr.bf16.mxu0 0
    %626 = vmatpush1.bf16.msra.mxu0 %v476
    %627 = vmatprep.subr.bf16.mxu0 0
    %628 = vmatpush2.bf16.msra.mxu0 %v521
    %629 = vmatprep.subr.bf16.mxu0 0
    %630 = vmatpush2.bf16.msra.mxu0 %v518
    %631 = vmatprep.subr.bf16.mxu0 0
    %632 = vmatpush2.bf16.msra.mxu0 %v515
    %633 = vmatprep.subr.bf16.mxu0 0
    %634 = vmatpush2.bf16.msra.mxu0 %v512
    %635 = vmatprep.subr.bf16.mxu0 0
    %636 = vmatpush2.bf16.msra.mxu0 %v509
    %637 = vmatprep.subr.bf16.mxu0 0
    %638 = vmatpush2.bf16.msra.mxu0 %v506
    %639 = vmatprep.subr.bf16.mxu0 0
    %640 = vmatpush2.bf16.msra.mxu0 %v503
    %641 = vmatprep.subr.bf16.mxu0 0
    %642 = vmatpush2.bf16.msra.mxu0 %v500
    %643 = vmatprep.mubr.bf16.mxu0 %v232
    %644 = vmatmul.mubr.bf16.gmra.mxu0 %v231
    %v645 = vpop.f32.mrf.mxu0
    %v646 = vadd.f32 %v310, %v645
    %v647 = vpop.f32.mrf.mxu0
    %v648 = vpop.f32.mrf.mxu0
    %v649 = vpop.f32.mrf.mxu0
    %650 = vdwg.mxu0
    %v651 = vmax.f32 %v605, 0.0
    %v652 = vmax.f32 %v607, 0.0
    %v653 = vmax.f32 %v646, 0.0
    %v654 = vpack.c.bf16 %v651, %v651
    %v655 = vpack.c.bf16 %v652, %v652
    %v656 = vpack.c.bf16 %v653, %v653
    %v657 = vld [vmem:[#allocation6] sm:$0xff]
    %v658 = vld [vmem:[#allocation6 + $0x8] sm:$0xff]
    %v659 = vld [vmem:[#allocation6 + $0x10] sm:$0xf]
    %v660 = vld [vmem:[#allocation6 + $0x14] sm:$0xff]
    %v661 = vld [vmem:[#allocation6 + $0x1c] sm:$0xff]
    %v662 = vld [vmem:[#allocation6 + $0x24] sm:$0xf]
    %v663 = vld [vmem:[#allocation6 + $0x28] sm:$0xff]
    %v664 = vld [vmem:[#allocation6 + $0x30] sm:$0xff]
    %v665 = vld [vmem:[#allocation6 + $0x38] sm:$0xf]
    %v666 = vld [vmem:[#allocation6 + $0x3c] sm:$0xff]
    %v667 = vld [vmem:[#allocation6 + $0x44] sm:$0xff]
    %v668 = vld [vmem:[#allocation6 + $0x4c] sm:$0xf]
    %v669 = vld [vmem:[#allocation6 + $0x50] sm:$0xff]
    %v670 = vld [vmem:[#allocation6 + $0x58] sm:$0xff]
    %v671 = vld [vmem:[#allocation6 + $0x60] sm:$0xf]
    %v672 = vld [vmem:[#allocation6 + $0x64] sm:$0xff]
    %v673 = vld [vmem:[#allocation6 + $0x6c] sm:$0xff]
    %v674 = vld [vmem:[#allocation6 + $0x74] sm:$0xf]
    %v675 = vld [vmem:[#allocation6 + $0x78] sm:$0xff]
    %v676 = vld [vmem:[#allocation6 + $0x80] sm:$0xff]
    %v677 = vld [vmem:[#allocation6 + $0x88] sm:$0xf]
    %v678 = vld [vmem:[#allocation6 + $0x8c] sm:$0xff]
    %v679 = vld [vmem:[#allocation6 + $0x94] sm:$0xff]
    %v680 = vld [vmem:[#allocation6 + $0x9c] sm:$0xf]
    %v681 = vld [vmem:[#allocation6 + $0xa0] sm:$0xff]
    %v682 = vld [vmem:[#allocation6 + $0xa8] sm:$0xff]
    %v683 = vld [vmem:[#allocation6 + $0xb0] sm:$0xf]
    %v684 = vld [vmem:[#allocation6 + $0xb4] sm:$0xff]
    %v685 = vld [vmem:[#allocation6 + $0xbc] sm:$0xff]
    %v686 = vld [vmem:[#allocation6 + $0xc4] sm:$0xf]
    %v687 = vld [vmem:[#allocation6 + $0xc8] sm:$0xff]
    %v688 = vld [vmem:[#allocation6 + $0xd0] sm:$0xff]
    %v689 = vld [vmem:[#allocation6 + $0xd8] sm:$0xf]
    %v690 = vld [vmem:[#allocation6 + $0xdc] sm:$0xff]
    %v691 = vld [vmem:[#allocation6 + $0xe4] sm:$0xff]
    %v692 = vld [vmem:[#allocation6 + $0xec] sm:$0xf]
    %v693 = vld [vmem:[#allocation6 + $0xf0] sm:$0xff]
    %v694 = vld [vmem:[#allocation6 + $0xf8] sm:$0xff]
    %v695 = vld [vmem:[#allocation6 + $0x100] sm:$0xf]
    %v696 = vld [vmem:[#allocation6 + $0x104] sm:$0xff]
    %v697 = vld [vmem:[#allocation6 + $0x10c] sm:$0xff]
    %v698 = vld [vmem:[#allocation6 + $0x114] sm:$0xf]
    %v699 = vld [vmem:[#allocation6 + $0x118] sm:$0xff]
    %v700 = vld [vmem:[#allocation6 + $0x120] sm:$0xff]
    %v701 = vld [vmem:[#allocation6 + $0x128] sm:$0xf]
    %v702 = vld [vmem:[#allocation6 + $0x12c] sm:$0xff]
    %v703 = vld [vmem:[#allocation6 + $0x134] sm:$0xff]
    %v704 = vld [vmem:[#allocation6 + $0x13c] sm:$0xf]
    %v705 = vld [vmem:[#allocation6 + $0x140] sm:$0xff]
    %v706 = vld [vmem:[#allocation6 + $0x148] sm:$0xff]
    %v707 = vld [vmem:[#allocation6 + $0x150] sm:$0xf]
    %v708 = vld [vmem:[#allocation6 + $0x154] sm:$0xff]
    %v709 = vld [vmem:[#allocation6 + $0x15c] sm:$0xff]
    %v710 = vld [vmem:[#allocation6 + $0x164] sm:$0xf]
    %v711 = vld [vmem:[#allocation6 + $0x168] sm:$0xff]
    %v712 = vld [vmem:[#allocation6 + $0x170] sm:$0xff]
    %v713 = vld [vmem:[#allocation6 + $0x178] sm:$0xf]
    %v714 = vld [vmem:[#allocation6 + $0x17c] sm:$0xff]
    %v715 = vld [vmem:[#allocation6 + $0x184] sm:$0xff]
    %v716 = vld [vmem:[#allocation6 + $0x18c] sm:$0xf]
    %v717 = vld [vmem:[#allocation6 + $0x190] sm:$0xff]
    %v718 = vld [vmem:[#allocation6 + $0x198] sm:$0xff]
    %v719 = vld [vmem:[#allocation6 + $0x1a0] sm:$0xf]
    %v720 = vld [vmem:[#allocation6 + $0x1a4] sm:$0xff]
    %v721 = vld [vmem:[#allocation6 + $0x1ac] sm:$0xff]
    %v722 = vld [vmem:[#allocation6 + $0x1b4] sm:$0xf]
    %v723 = vld [vmem:[#allocation6 + $0x1b8] sm:$0xff]
    %v724 = vld [vmem:[#allocation6 + $0x1c0] sm:$0xff]
    %v725 = vld [vmem:[#allocation6 + $0x1c8] sm:$0xf]
    %v726 = vld [vmem:[#allocation6 + $0x1cc] sm:$0xff]
    %v727 = vld [vmem:[#allocation6 + $0x1d4] sm:$0xff]
    %v728 = vld [vmem:[#allocation6 + $0x1dc] sm:$0xf]
    %v729 = vld [vmem:[#allocation6 + $0x1e0] sm:$0xff]
    %v730 = vld [vmem:[#allocation6 + $0x1e8] sm:$0xff]
    %v731 = vld [vmem:[#allocation6 + $0x1f0] sm:$0xf]
    %v732 = vld [vmem:[#allocation6 + $0x1f4] sm:$0xff]
    %v733 = vld [vmem:[#allocation6 + $0x1fc] sm:$0xff]
    %v734 = vld [vmem:[#allocation6 + $0x204] sm:$0xf]
    %v735 = vld [vmem:[#allocation6 + $0x208] sm:$0xff]
    %v736 = vld [vmem:[#allocation6 + $0x210] sm:$0xff]
    %v737 = vld [vmem:[#allocation6 + $0x218] sm:$0xf]
    %v738 = vld [vmem:[#allocation6 + $0x21c] sm:$0xff]
    %v739 = vld [vmem:[#allocation6 + $0x224] sm:$0xff]
    %v740 = vld [vmem:[#allocation6 + $0x22c] sm:$0xf]
    %v741 = vld [vmem:[#allocation6 + $0x230] sm:$0xff]
    %v742 = vld [vmem:[#allocation6 + $0x238] sm:$0xff]
    %v743 = vld [vmem:[#allocation6 + $0x240] sm:$0xf]
    %v744 = vld [vmem:[#allocation6 + $0x244] sm:$0xff]
    %v745 = vld [vmem:[#allocation6 + $0x24c] sm:$0xff]
    %v746 = vld [vmem:[#allocation6 + $0x254] sm:$0xf]
    %v747 = vld [vmem:[#allocation6 + $0x258] sm:$0xff]
    %v748 = vld [vmem:[#allocation6 + $0x260] sm:$0xff]
    %v749 = vld [vmem:[#allocation6 + $0x268] sm:$0xf]
    %v750 = vld [vmem:[#allocation6 + $0x26c] sm:$0xff]
    %v751 = vld [vmem:[#allocation6 + $0x274] sm:$0xff]
    %v752 = vld [vmem:[#allocation6 + $0x27c] sm:$0xf]
    %v753 = vld [vmem:[#allocation6 + $0x280] sm:$0xff]
    %v754 = vld [vmem:[#allocation6 + $0x288] sm:$0xff]
    %v755 = vld [vmem:[#allocation6 + $0x290] sm:$0xf]
    %v756 = vld [vmem:[#allocation6 + $0x294] sm:$0xff]
    %v757 = vld [vmem:[#allocation6 + $0x29c] sm:$0xff]
    %v758 = vld [vmem:[#allocation6 + $0x2a4] sm:$0xf]
    %v759 = vld [vmem:[#allocation6 + $0x2a8] sm:$0xff]
    %v760 = vld [vmem:[#allocation6 + $0x2b0] sm:$0xff]
    %v761 = vld [vmem:[#allocation6 + $0x2b8] sm:$0xf]
    %v762 = vld [vmem:[#allocation6 + $0x2bc] sm:$0xff]
    %v763 = vld [vmem:[#allocation6 + $0x2c4] sm:$0xff]
    %v764 = vld [vmem:[#allocation6 + $0x2cc] sm:$0xf]
    %v765 = vld [vmem:[#allocation6 + $0x2d0] sm:$0xff]
    %v766 = vld [vmem:[#allocation6 + $0x2d8] sm:$0xff]
    %v767 = vld [vmem:[#allocation6 + $0x2e0] sm:$0xf]
    %v768 = vld [vmem:[#allocation6 + $0x2e4] sm:$0xff]
    %v769 = vld [vmem:[#allocation6 + $0x2ec] sm:$0xff]
    %v770 = vld [vmem:[#allocation6 + $0x2f4] sm:$0xf]
    %v771 = vld [vmem:[#allocation6 + $0x2f8] sm:$0xff]
    %v772 = vld [vmem:[#allocation6 + $0x300] sm:$0xff]
    %v773 = vld [vmem:[#allocation6 + $0x308] sm:$0xf]
    %v774 = vld [vmem:[#allocation6 + $0x30c] sm:$0xff]
    %v775 = vld [vmem:[#allocation6 + $0x314] sm:$0xff]
    %v776 = vld [vmem:[#allocation6 + $0x31c] sm:$0xf]
    %v777 = vld [vmem:[#allocation6 + $0x320] sm:$0xff]
    %v778 = vld [vmem:[#allocation6 + $0x328] sm:$0xff]
    %v779 = vld [vmem:[#allocation6 + $0x330] sm:$0xf]
    %v780 = vld [vmem:[#allocation6 + $0x334] sm:$0xff]
    %v781 = vld [vmem:[#allocation6 + $0x33c] sm:$0xff]
    %v782 = vld [vmem:[#allocation6 + $0x344] sm:$0xf]
    %v783 = vld [vmem:[#allocation6 + $0x348] sm:$0xff]
    %v784 = vld [vmem:[#allocation6 + $0x350] sm:$0xff]
    %v785 = vld [vmem:[#allocation6 + $0x358] sm:$0xf]
    %v786 = vld [vmem:[#allocation6 + $0x35c] sm:$0xff]
    %v787 = vld [vmem:[#allocation6 + $0x364] sm:$0xff]
    %v788 = vld [vmem:[#allocation6 + $0x36c] sm:$0xf]
    %v789 = vld [vmem:[#allocation6 + $0x370] sm:$0xff]
    %v790 = vld [vmem:[#allocation6 + $0x378] sm:$0xff]
    %v791 = vld [vmem:[#allocation6 + $0x380] sm:$0xf]
    %v792 = vld [vmem:[#allocation6 + $0x384] sm:$0xff]
    %v793 = vld [vmem:[#allocation6 + $0x38c] sm:$0xff]
    %v794 = vld [vmem:[#allocation6 + $0x394] sm:$0xf]
    %v795 = vld [vmem:[#allocation6 + $0x398] sm:$0xff]
    %v796 = vld [vmem:[#allocation6 + $0x3a0] sm:$0xff]
    %v797 = vld [vmem:[#allocation6 + $0x3a8] sm:$0xf]
    %v798 = vld [vmem:[#allocation6 + $0x3ac] sm:$0xff]
    %v799 = vld [vmem:[#allocation6 + $0x3b4] sm:$0xff]
    %v800 = vld [vmem:[#allocation6 + $0x3bc] sm:$0xf]
    %v801 = vld [vmem:[%s5 + $0x5] sm:$0x1f]
    %v803 = vlaneseq
    %v804 = vshrl.u32 %v803, 7
    %v805 = vsub.s32 0, %v804
    %v806 = vrot.slane %v801, %v805
    %v807 = vlaneseq
    %v808 = vshrl.u32 %v807, 7
    %v809 = vsub.s32 1, %v808
    %v810 = vrot.slane %v801, %v809
    %v811 = vlaneseq
    %v812 = vshrl.u32 %v811, 7
    %v813 = vsub.s32 2, %v812
    %v814 = vrot.slane %v801, %v813
    %v815 = vlaneseq
    %v816 = vshrl.u32 %v815, 7
    %v817 = vsub.s32 3, %v816
    %v818 = vrot.slane %v801, %v817
    %v819 = vlaneseq
    %v820 = vshrl.u32 %v819, 7
    %v821 = vsub.s32 4, %v820
    %v822 = vrot.slane %v801, %v821
    %v972 = vunpack.c.l.b16 %v657
    %v973 = vunpack.c.h.b16 %v657
    %v974 = vunpack.c.l.b16 %v658
    %v975 = vunpack.c.h.b16 %v658
    %v976 = vunpack.c.l.b16 %v659
    %v977 = vunpack.c.l.b16 %v660
    %v978 = vunpack.c.h.b16 %v660
    %v979 = vunpack.c.l.b16 %v661
    %v980 = vunpack.c.h.b16 %v661
    %v981 = vunpack.c.l.b16 %v662
    %v982 = vunpack.c.l.b16 %v663
    %v983 = vunpack.c.h.b16 %v663
    %v984 = vunpack.c.l.b16 %v664
    %v985 = vunpack.c.h.b16 %v664
    %v986 = vunpack.c.l.b16 %v665
    %v987 = vunpack.c.l.b16 %v666
    %v988 = vunpack.c.h.b16 %v666
    %v989 = vunpack.c.l.b16 %v667
    %v990 = vunpack.c.h.b16 %v667
    %v991 = vunpack.c.l.b16 %v668
    %v992 = vunpack.c.l.b16 %v669
    %v993 = vunpack.c.h.b16 %v669
    %v994 = vunpack.c.l.b16 %v670
    %v995 = vunpack.c.h.b16 %v670
    %v996 = vunpack.c.l.b16 %v671
    %v997 = vunpack.c.l.b16 %v672
    %v998 = vunpack.c.h.b16 %v672
    %v999 = vunpack.c.l.b16 %v673
    %v1000 = vunpack.c.h.b16 %v673
    %v1001 = vunpack.c.l.b16 %v674
    %v1002 = vunpack.c.l.b16 %v675
    %v1003 = vunpack.c.h.b16 %v675
    %v1004 = vunpack.c.l.b16 %v676
    %v1005 = vunpack.c.h.b16 %v676
    %v1006 = vunpack.c.l.b16 %v677
    %v1007 = vunpack.c.l.b16 %v678
    %v1008 = vunpack.c.h.b16 %v678
    %v1009 = vunpack.c.l.b16 %v679
    %v1010 = vunpack.c.h.b16 %v679
    %v1011 = vunpack.c.l.b16 %v680
    %v1012 = vunpack.c.l.b16 %v681
    %v1013 = vunpack.c.h.b16 %v681
    %v1014 = vunpack.c.l.b16 %v682
    %v1015 = vunpack.c.h.b16 %v682
    %v1016 = vunpack.c.l.b16 %v683
    %v1017 = vunpack.c.l.b16 %v684
    %v1018 = vunpack.c.h.b16 %v684
    %v1019 = vunpack.c.l.b16 %v685
    %v1020 = vunpack.c.h.b16 %v685
    %v1021 = vunpack.c.l.b16 %v686
    %v1022 = vunpack.c.l.b16 %v687
    %v1023 = vunpack.c.h.b16 %v687
    %v1024 = vunpack.c.l.b16 %v688
    %v1025 = vunpack.c.h.b16 %v688
    %v1026 = vunpack.c.l.b16 %v689
    %v1027 = vunpack.c.l.b16 %v690
    %v1028 = vunpack.c.h.b16 %v690
    %v1029 = vunpack.c.l.b16 %v691
    %v1030 = vunpack.c.h.b16 %v691
    %v1031 = vunpack.c.l.b16 %v692
    %v1032 = vunpack.c.l.b16 %v693
    %v1033 = vunpack.c.h.b16 %v693
    %v1034 = vunpack.c.l.b16 %v694
    %v1035 = vunpack.c.h.b16 %v694
    %v1036 = vunpack.c.l.b16 %v695
    %v1037 = vunpack.c.l.b16 %v696
    %v1038 = vunpack.c.h.b16 %v696
    %v1039 = vunpack.c.l.b16 %v697
    %v1040 = vunpack.c.h.b16 %v697
    %v1041 = vunpack.c.l.b16 %v698
    %v1042 = vunpack.c.l.b16 %v699
    %v1043 = vunpack.c.h.b16 %v699
    %v1044 = vunpack.c.l.b16 %v700
    %v1045 = vunpack.c.h.b16 %v700
    %v1046 = vunpack.c.l.b16 %v701
    %v1047 = vunpack.c.l.b16 %v702
    %v1048 = vunpack.c.h.b16 %v702
    %v1049 = vunpack.c.l.b16 %v703
    %v1050 = vunpack.c.h.b16 %v703
    %v1051 = vunpack.c.l.b16 %v704
    %v1052 = vunpack.c.l.b16 %v705
    %v1053 = vunpack.c.h.b16 %v705
    %v1054 = vunpack.c.l.b16 %v706
    %v1055 = vunpack.c.h.b16 %v706
    %v1056 = vunpack.c.l.b16 %v707
    %v1057 = vunpack.c.l.b16 %v708
    %v1058 = vunpack.c.h.b16 %v708
    %v1059 = vunpack.c.l.b16 %v709
    %v1060 = vunpack.c.h.b16 %v709
    %v1061 = vunpack.c.l.b16 %v710
    %v1062 = vunpack.c.l.b16 %v711
    %v1063 = vunpack.c.h.b16 %v711
    %v1064 = vunpack.c.l.b16 %v712
    %v1065 = vunpack.c.h.b16 %v712
    %v1066 = vunpack.c.l.b16 %v713
    %v1067 = vunpack.c.l.b16 %v714
    %v1068 = vunpack.c.h.b16 %v714
    %v1069 = vunpack.c.l.b16 %v715
    %v1070 = vunpack.c.h.b16 %v715
    %v1071 = vunpack.c.l.b16 %v716
    %v1072 = vunpack.c.l.b16 %v717
    %v1073 = vunpack.c.h.b16 %v717
    %v1074 = vunpack.c.l.b16 %v718
    %v1075 = vunpack.c.h.b16 %v718
    %v1076 = vunpack.c.l.b16 %v719
    %v1077 = vunpack.c.l.b16 %v720
    %v1078 = vunpack.c.h.b16 %v720
    %v1079 = vunpack.c.l.b16 %v721
    %v1080 = vunpack.c.h.b16 %v721
    %v1081 = vunpack.c.l.b16 %v722
    %v1082 = vunpack.c.l.b16 %v723
    %v1083 = vunpack.c.h.b16 %v723
    %v1084 = vunpack.c.l.b16 %v724
    %v1085 = vunpack.c.h.b16 %v724
    %v1086 = vunpack.c.l.b16 %v725
    %v1087 = vunpack.c.l.b16 %v726
    %v1088 = vunpack.c.h.b16 %v726
    %v1089 = vunpack.c.l.b16 %v727
    %v1090 = vunpack.c.h.b16 %v727
    %v1091 = vunpack.c.l.b16 %v728
    %v1092 = vunpack.c.l.b16 %v729
    %v1093 = vunpack.c.h.b16 %v729
    %v1094 = vunpack.c.l.b16 %v730
    %v1095 = vunpack.c.h.b16 %v730
    %v1096 = vunpack.c.l.b16 %v731
    %v1097 = vunpack.c.l.b16 %v732
    %v1098 = vunpack.c.h.b16 %v732
    %v1099 = vunpack.c.l.b16 %v733
    %v1100 = vunpack.c.h.b16 %v733
    %v1101 = vunpack.c.l.b16 %v734
    %v1102 = vunpack.c.l.b16 %v735
    %v1103 = vunpack.c.h.b16 %v735
    %v1104 = vunpack.c.l.b16 %v736
    %v1105 = vunpack.c.h.b16 %v736
    %v1106 = vunpack.c.l.b16 %v737
    %v1107 = vunpack.c.l.b16 %v738
    %v1108 = vunpack.c.h.b16 %v738
    %v1109 = vunpack.c.l.b16 %v739
    %v1110 = vunpack.c.h.b16 %v739
    %v1111 = vunpack.c.l.b16 %v740
    %v1112 = vunpack.c.l.b16 %v741
    %v1113 = vunpack.c.h.b16 %v741
    %v1114 = vunpack.c.l.b16 %v742
    %v1115 = vunpack.c.h.b16 %v742
    %v1116 = vunpack.c.l.b16 %v743
    %v1117 = vunpack.c.l.b16 %v744
    %v1118 = vunpack.c.h.b16 %v744
    %v1119 = vunpack.c.l.b16 %v745
    %v1120 = vunpack.c.h.b16 %v745
    %v1121 = vunpack.c.l.b16 %v746
    %v1122 = vunpack.c.l.b16 %v747
    %v1123 = vunpack.c.h.b16 %v747
    %v1124 = vunpack.c.l.b16 %v748
    %v1125 = vunpack.c.h.b16 %v748
    %v1126 = vunpack.c.l.b16 %v749
    %v1127 = vunpack.c.l.b16 %v750
    %v1128 = vunpack.c.h.b16 %v750
    %v1129 = vunpack.c.l.b16 %v751
    %v1130 = vunpack.c.h.b16 %v751
    %v1131 = vunpack.c.l.b16 %v752
    %v1132 = vunpack.c.l.b16 %v753
    %v1133 = vunpack.c.h.b16 %v753
    %v1134 = vunpack.c.l.b16 %v754
    %v1135 = vunpack.c.h.b16 %v754
    %v1136 = vunpack.c.l.b16 %v755
    %v1137 = vunpack.c.l.b16 %v756
    %v1138 = vunpack.c.h.b16 %v756
    %v1139 = vunpack.c.l.b16 %v757
    %v1140 = vunpack.c.h.b16 %v757
    %v1141 = vunpack.c.l.b16 %v758
    %v1142 = vunpack.c.l.b16 %v759
    %v1143 = vunpack.c.h.b16 %v759
    %v1144 = vunpack.c.l.b16 %v760
    %v1145 = vunpack.c.h.b16 %v760
    %v1146 = vunpack.c.l.b16 %v761
    %v1147 = vunpack.c.l.b16 %v762
    %v1148 = vunpack.c.h.b16 %v762
    %v1149 = vunpack.c.l.b16 %v763
    %v1150 = vunpack.c.h.b16 %v763
    %v1151 = vunpack.c.l.b16 %v764
    %v1152 = vunpack.c.l.b16 %v765
    %v1153 = vunpack.c.h.b16 %v765
    %v1154 = vunpack.c.l.b16 %v766
    %v1155 = vunpack.c.h.b16 %v766
    %v1156 = vunpack.c.l.b16 %v767
    %v1157 = vunpack.c.l.b16 %v768
    %v1158 = vunpack.c.h.b16 %v768
    %v1159 = vunpack.c.l.b16 %v769
    %v1160 = vunpack.c.h.b16 %v769
    %v1161 = vunpack.c.l.b16 %v770
    %v1162 = vunpack.c.l.b16 %v771
    %v1163 = vunpack.c.h.b16 %v771
    %v1164 = vunpack.c.l.b16 %v772
    %v1165 = vunpack.c.h.b16 %v772
    %v1166 = vunpack.c.l.b16 %v773
    %v1167 = vunpack.c.l.b16 %v774
    %v1168 = vunpack.c.h.b16 %v774
    %v1169 = vunpack.c.l.b16 %v775
    %v1170 = vunpack.c.h.b16 %v775
    %v1171 = vunpack.c.l.b16 %v776
    %v1172 = vunpack.c.l.b16 %v777
    %v1173 = vunpack.c.h.b16 %v777
    %v1174 = vunpack.c.l.b16 %v778
    %v1175 = vunpack.c.h.b16 %v778
    %v1176 = vunpack.c.l.b16 %v779
    %v1177 = vunpack.c.l.b16 %v780
    %v1178 = vunpack.c.h.b16 %v780
    %v1179 = vunpack.c.l.b16 %v781
    %v1180 = vunpack.c.h.b16 %v781
    %v1181 = vunpack.c.l.b16 %v782
    %v1182 = vunpack.c.l.b16 %v783
    %v1183 = vunpack.c.h.b16 %v783
    %v1184 = vunpack.c.l.b16 %v784
    %v1185 = vunpack.c.h.b16 %v784
    %v1186 = vunpack.c.l.b16 %v785
    %v1187 = vunpack.c.l.b16 %v786
    %v1188 = vunpack.c.h.b16 %v786
    %v1189 = vunpack.c.l.b16 %v787
    %v1190 = vunpack.c.h.b16 %v787
    %v1191 = vunpack.c.l.b16 %v788
    %v1192 = vunpack.c.l.b16 %v789
    %v1193 = vunpack.c.h.b16 %v789
    %v1194 = vunpack.c.l.b16 %v790
    %v1195 = vunpack.c.h.b16 %v790
    %v1196 = vunpack.c.l.b16 %v791
    %v1197 = vunpack.c.l.b16 %v792
    %v1198 = vunpack.c.h.b16 %v792
    %v1199 = vunpack.c.l.b16 %v793
    %v1200 = vunpack.c.h.b16 %v793
    %v1201 = vunpack.c.l.b16 %v794
    %v1202 = vunpack.c.l.b16 %v795
    %v1203 = vunpack.c.h.b16 %v795
    %v1204 = vunpack.c.l.b16 %v796
    %v1205 = vunpack.c.h.b16 %v796
    %v1206 = vunpack.c.l.b16 %v797
    %v1207 = vunpack.c.l.b16 %v798
    %v1208 = vunpack.c.h.b16 %v798
    %v1209 = vunpack.c.l.b16 %v799
    %v1210 = vunpack.c.h.b16 %v799
    %v1211 = vunpack.c.l.b16 %v800
    %v1212 = vpack.c.b16 %v977, %v972
    %v1213 = vpack.c.b16 %v978, %v973
    %v1214 = vpack.c.b16 %v979, %v974
    %v1215 = vpack.c.b16 %v980, %v975
    %v1216 = vpack.c.b16 %v981, %v976
    %v1217 = vpack.c.b16 %v987, %v982
    %v1218 = vpack.c.b16 %v988, %v983
    %v1219 = vpack.c.b16 %v989, %v984
    %v1220 = vpack.c.b16 %v990, %v985
    %v1221 = vpack.c.b16 %v991, %v986
    %v1222 = vpack.c.b16 %v997, %v992
    %v1223 = vpack.c.b16 %v998, %v993
    %v1224 = vpack.c.b16 %v999, %v994
    %v1225 = vpack.c.b16 %v1000, %v995
    %v1226 = vpack.c.b16 %v1001, %v996
    %v1227 = vpack.c.b16 %v1007, %v1002
    %v1228 = vpack.c.b16 %v1008, %v1003
    %v1229 = vpack.c.b16 %v1009, %v1004
    %v1230 = vpack.c.b16 %v1010, %v1005
    %v1231 = vpack.c.b16 %v1011, %v1006
    %v1232 = vpack.c.b16 %v1017, %v1012
    %v1233 = vpack.c.b16 %v1018, %v1013
    %v1234 = vpack.c.b16 %v1019, %v1014
    %v1235 = vpack.c.b16 %v1020, %v1015
    %v1236 = vpack.c.b16 %v1021, %v1016
    %v1237 = vpack.c.b16 %v1027, %v1022
    %v1238 = vpack.c.b16 %v1028, %v1023
    %v1239 = vpack.c.b16 %v1029, %v1024
    %v1240 = vpack.c.b16 %v1030, %v1025
    %v1241 = vpack.c.b16 %v1031, %v1026
    %v1242 = vpack.c.b16 %v1037, %v1032
    %v1243 = vpack.c.b16 %v1038, %v1033
    %v1244 = vpack.c.b16 %v1039, %v1034
    %v1245 = vpack.c.b16 %v1040, %v1035
    %v1246 = vpack.c.b16 %v1041, %v1036
    %v1247 = vpack.c.b16 %v1047, %v1042
    %v1248 = vpack.c.b16 %v1048, %v1043
    %v1249 = vpack.c.b16 %v1049, %v1044
    %v1250 = vpack.c.b16 %v1050, %v1045
    %v1251 = vpack.c.b16 %v1051, %v1046
    %v1252 = vpack.c.b16 %v1057, %v1052
    %v1253 = vpack.c.b16 %v1058, %v1053
    %v1254 = vpack.c.b16 %v1059, %v1054
    %v1255 = vpack.c.b16 %v1060, %v1055
    %v1256 = vpack.c.b16 %v1061, %v1056
    %v1257 = vpack.c.b16 %v1067, %v1062
    %v1258 = vpack.c.b16 %v1068, %v1063
    %v1259 = vpack.c.b16 %v1069, %v1064
    %v1260 = vpack.c.b16 %v1070, %v1065
    %v1261 = vpack.c.b16 %v1071, %v1066
    %v1262 = vpack.c.b16 %v1077, %v1072
    %v1263 = vpack.c.b16 %v1078, %v1073
    %v1264 = vpack.c.b16 %v1079, %v1074
    %v1265 = vpack.c.b16 %v1080, %v1075
    %v1266 = vpack.c.b16 %v1081, %v1076
    %v1267 = vpack.c.b16 %v1087, %v1082
    %v1268 = vpack.c.b16 %v1088, %v1083
    %v1269 = vpack.c.b16 %v1089, %v1084
    %v1270 = vpack.c.b16 %v1090, %v1085
    %v1271 = vpack.c.b16 %v1091, %v1086
    %v1272 = vpack.c.b16 %v1097, %v1092
    %v1273 = vpack.c.b16 %v1098, %v1093
    %v1274 = vpack.c.b16 %v1099, %v1094
    %v1275 = vpack.c.b16 %v1100, %v1095
    %v1276 = vpack.c.b16 %v1101, %v1096
    %v1277 = vpack.c.b16 %v1107, %v1102
    %v1278 = vpack.c.b16 %v1108, %v1103
    %v1279 = vpack.c.b16 %v1109, %v1104
    %v1280 = vpack.c.b16 %v1110, %v1105
    %v1281 = vpack.c.b16 %v1111, %v1106
    %v1282 = vpack.c.b16 %v1117, %v1112
    %v1283 = vpack.c.b16 %v1118, %v1113
    %v1284 = vpack.c.b16 %v1119, %v1114
    %v1285 = vpack.c.b16 %v1120, %v1115
    %v1286 = vpack.c.b16 %v1121, %v1116
    %v1287 = vpack.c.b16 %v1127, %v1122
    %v1288 = vpack.c.b16 %v1128, %v1123
    %v1289 = vpack.c.b16 %v1129, %v1124
    %v1290 = vpack.c.b16 %v1130, %v1125
    %v1291 = vpack.c.b16 %v1131, %v1126
    %v1292 = vpack.c.b16 %v1137, %v1132
    %v1293 = vpack.c.b16 %v1138, %v1133
    %v1294 = vpack.c.b16 %v1139, %v1134
    %v1295 = vpack.c.b16 %v1140, %v1135
    %v1296 = vpack.c.b16 %v1141, %v1136
    %v1297 = vpack.c.b16 %v1147, %v1142
    %v1298 = vpack.c.b16 %v1148, %v1143
    %v1299 = vpack.c.b16 %v1149, %v1144
    %v1300 = vpack.c.b16 %v1150, %v1145
    %v1301 = vpack.c.b16 %v1151, %v1146
    %v1302 = vpack.c.b16 %v1157, %v1152
    %v1303 = vpack.c.b16 %v1158, %v1153
    %v1304 = vpack.c.b16 %v1159, %v1154
    %v1305 = vpack.c.b16 %v1160, %v1155
    %v1306 = vpack.c.b16 %v1161, %v1156
    %v1307 = vpack.c.b16 %v1167, %v1162
    %v1308 = vpack.c.b16 %v1168, %v1163
    %v1309 = vpack.c.b16 %v1169, %v1164
    %v1310 = vpack.c.b16 %v1170, %v1165
    %v1311 = vpack.c.b16 %v1171, %v1166
    %v1312 = vpack.c.b16 %v1177, %v1172
    %v1313 = vpack.c.b16 %v1178, %v1173
    %v1314 = vpack.c.b16 %v1179, %v1174
    %v1315 = vpack.c.b16 %v1180, %v1175
    %v1316 = vpack.c.b16 %v1181, %v1176
    %v1317 = vpack.c.b16 %v1187, %v1182
    %v1318 = vpack.c.b16 %v1188, %v1183
    %v1319 = vpack.c.b16 %v1189, %v1184
    %v1320 = vpack.c.b16 %v1190, %v1185
    %v1321 = vpack.c.b16 %v1191, %v1186
    %v1322 = vpack.c.b16 %v1197, %v1192
    %v1323 = vpack.c.b16 %v1198, %v1193
    %v1324 = vpack.c.b16 %v1199, %v1194
    %v1325 = vpack.c.b16 %v1200, %v1195
    %v1326 = vpack.c.b16 %v1201, %v1196
    %v1327 = vpack.c.b16 %v1207, %v1202
    %v1328 = vpack.c.b16 %v1208, %v1203
    %v1329 = vpack.c.b16 %v1209, %v1204
    %v1330 = vpack.c.b16 %v1210, %v1205
    %v1331 = vpack.c.b16 %v1211, %v1206
    %1452 = vmatprep.subr.bf16.mxu0 %v1248
    %1453 = vmatpush1.bf16.msra.mxu0 %v1247
    %1454 = vmatprep.subr.bf16.mxu0 %v1243
    %1455 = vmatpush1.bf16.msra.mxu0 %v1242
    %1456 = vmatprep.subr.bf16.mxu0 %v1238
    %1457 = vmatpush1.bf16.msra.mxu0 %v1237
    %1458 = vmatprep.subr.bf16.mxu0 %v1233
    %1459 = vmatpush1.bf16.msra.mxu0 %v1232
    %1460 = vmatprep.subr.bf16.mxu0 %v1228
    %1461 = vmatpush1.bf16.msra.mxu0 %v1227
    %1462 = vmatprep.subr.bf16.mxu0 %v1223
    %1463 = vmatpush1.bf16.msra.mxu0 %v1222
    %1464 = vmatprep.subr.bf16.mxu0 %v1218
    %1465 = vmatpush1.bf16.msra.mxu0 %v1217
    %1466 = vmatprep.subr.bf16.mxu0 %v1213
    %1467 = vmatpush1.bf16.msra.mxu0 %v1212
    %1468 = vmatprep.subr.bf16.mxu0 %v1288
    %1469 = vmatpush2.bf16.msra.mxu0 %v1287
    %1470 = vmatprep.subr.bf16.mxu0 %v1283
    %1471 = vmatpush2.bf16.msra.mxu0 %v1282
    %1472 = vmatprep.subr.bf16.mxu0 %v1278
    %1473 = vmatpush2.bf16.msra.mxu0 %v1277
    %1474 = vmatprep.subr.bf16.mxu0 %v1273
    %1475 = vmatpush2.bf16.msra.mxu0 %v1272
    %1476 = vmatprep.subr.bf16.mxu0 %v1268
    %1477 = vmatpush2.bf16.msra.mxu0 %v1267
    %1478 = vmatprep.subr.bf16.mxu0 %v1263
    %1479 = vmatpush2.bf16.msra.mxu0 %v1262
    %1480 = vmatprep.subr.bf16.mxu0 %v1258
    %1481 = vmatpush2.bf16.msra.mxu0 %v1257
    %1482 = vmatprep.subr.bf16.mxu0 %v1253
    %1483 = vmatpush2.bf16.msra.mxu0 %v1252
    %1484 = vmatprep.mubr.bf16.mxu0 %v655
    %1485 = vmatmul.mubr.bf16.gmra.mxu0 %v654
    %v1486 = vpop.f32.mrf.mxu0
    %v1487 = vadd.f32 %v806, %v1486
    %v1488 = vpop.f32.mrf.mxu0
    %v1489 = vadd.f32 %v810, %v1488
    %v1490 = vpop.f32.mrf.mxu0
    %v1491 = vpop.f32.mrf.mxu0
    %1492 = vdwg.mxu0
    %1493 = vmatprep.subr.bf16.mxu0 %v1328
    %1494 = vmatpush1.bf16.msra.mxu0 %v1327
    %1495 = vmatprep.subr.bf16.mxu0 %v1323
    %1496 = vmatpush1.bf16.msra.mxu0 %v1322
    %1497 = vmatprep.subr.bf16.mxu0 %v1318
    %1498 = vmatpush1.bf16.msra.mxu0 %v1317
    %1499 = vmatprep.subr.bf16.mxu0 %v1313
    %1500 = vmatpush1.bf16.msra.mxu0 %v1312
    %1501 = vmatprep.subr.bf16.mxu0 %v1308
    %1502 = vmatpush1.bf16.msra.mxu0 %v1307
    %1503 = vmatprep.subr.bf16.mxu0 %v1303
    %1504 = vmatpush1.bf16.msra.mxu0 %v1302
    %1505 = vmatprep.subr.bf16.mxu0 %v1298
    %1506 = vmatpush1.bf16.msra.mxu0 %v1297
    %1507 = vmatprep.subr.bf16.mxu0 %v1293
    %1508 = vmatpush1.bf16.msra.mxu0 %v1292
    %1509 = vmatprep.subr.bf16.mxu0 0
    %1510 = vmatpush2.bf16.msra.mxu0 0
    %1511 = vmatprep.subr.bf16.mxu0 0
    %1512 = vmatpush2.bf16.msra.mxu0 0
    %1513 = vmatprep.subr.bf16.mxu0 0
    %1514 = vmatpush2.bf16.msra.mxu0 0
    %1515 = vmatprep.subr.bf16.mxu0 0
    %1516 = vmatpush2.bf16.msra.mxu0 0
    %1517 = vmatprep.subr.bf16.mxu0 0
    %1518 = vmatpush2.bf16.msra.mxu0 0
    %1519 = vmatprep.subr.bf16.mxu0 0
    %1520 = vmatpush2.bf16.msra.mxu0 0
    %1521 = vmatprep.subr.bf16.mxu0 0
    %1522 = vmatpush2.bf16.msra.mxu0 0
    %1523 = vmatprep.subr.bf16.mxu0 0
    %1524 = vmatpush2.bf16.msra.mxu0 0
    %1525 = vmatprep.mubr.bf16.mxu0 0
    %1526 = vmatmul.mubr.bf16.gmra.mxu0 %v656
    %v1527 = vpop.f32.mrf.mxu0
    %v1528 = vadd.f32 %v1487, %v1527
    %v1529 = vpop.f32.mrf.mxu0
    %v1530 = vadd.f32 %v1489, %v1529
    %v1531 = vpop.f32.mrf.mxu0
    %v1532 = vpop.f32.mrf.mxu0
    %1533 = vdwg.mxu0
    %1534 = vmatprep.subr.bf16.mxu0 %v1250
    %1535 = vmatpush1.bf16.msra.mxu0 %v1249
    %1536 = vmatprep.subr.bf16.mxu0 %v1245
    %1537 = vmatpush1.bf16.msra.mxu0 %v1244
    %1538 = vmatprep.subr.bf16.mxu0 %v1240
    %1539 = vmatpush1.bf16.msra.mxu0 %v1239
    %1540 = vmatprep.subr.bf16.mxu0 %v1235
    %1541 = vmatpush1.bf16.msra.mxu0 %v1234
    %1542 = vmatprep.subr.bf16.mxu0 %v1230
    %1543 = vmatpush1.bf16.msra.mxu0 %v1229
    %1544 = vmatprep.subr.bf16.mxu0 %v1225
    %1545 = vmatpush1.bf16.msra.mxu0 %v1224
    %1546 = vmatprep.subr.bf16.mxu0 %v1220
    %1547 = vmatpush1.bf16.msra.mxu0 %v1219
    %1548 = vmatprep.subr.bf16.mxu0 %v1215
    %1549 = vmatpush1.bf16.msra.mxu0 %v1214
    %1550 = vmatprep.subr.bf16.mxu0 %v1290
    %1551 = vmatpush2.bf16.msra.mxu0 %v1289
    %1552 = vmatprep.subr.bf16.mxu0 %v1285
    %1553 = vmatpush2.bf16.msra.mxu0 %v1284
    %1554 = vmatprep.subr.bf16.mxu0 %v1280
    %1555 = vmatpush2.bf16.msra.mxu0 %v1279
    %1556 = vmatprep.subr.bf16.mxu0 %v1275
    %1557 = vmatpush2.bf16.msra.mxu0 %v1274
    %1558 = vmatprep.subr.bf16.mxu0 %v1270
    %1559 = vmatpush2.bf16.msra.mxu0 %v1269
    %1560 = vmatprep.subr.bf16.mxu0 %v1265
    %1561 = vmatpush2.bf16.msra.mxu0 %v1264
    %1562 = vmatprep.subr.bf16.mxu0 %v1260
    %1563 = vmatpush2.bf16.msra.mxu0 %v1259
    %1564 = vmatprep.subr.bf16.mxu0 %v1255
    %1565 = vmatpush2.bf16.msra.mxu0 %v1254
    %1566 = vmatprep.mubr.bf16.mxu0 %v655
    %1567 = vmatmul.mubr.bf16.gmra.mxu0 %v654
    %v1568 = vpop.f32.mrf.mxu0
    %v1569 = vadd.f32 %v814, %v1568
    %v1570 = vpop.f32.mrf.mxu0
    %v1571 = vadd.f32 %v818, %v1570
    %v1572 = vpop.f32.mrf.mxu0
    %v1573 = vpop.f32.mrf.mxu0
    %1574 = vdwg.mxu0
    %1575 = vmatprep.subr.bf16.mxu0 %v1330
    %1576 = vmatpush1.bf16.msra.mxu0 %v1329
    %1577 = vmatprep.subr.bf16.mxu0 %v1325
    %1578 = vmatpush1.bf16.msra.mxu0 %v1324
    %1579 = vmatprep.subr.bf16.mxu0 %v1320
    %1580 = vmatpush1.bf16.msra.mxu0 %v1319
    %1581 = vmatprep.subr.bf16.mxu0 %v1315
    %1582 = vmatpush1.bf16.msra.mxu0 %v1314
    %1583 = vmatprep.subr.bf16.mxu0 %v1310
    %1584 = vmatpush1.bf16.msra.mxu0 %v1309
    %1585 = vmatprep.subr.bf16.mxu0 %v1305
    %1586 = vmatpush1.bf16.msra.mxu0 %v1304
    %1587 = vmatprep.subr.bf16.mxu0 %v1300
    %1588 = vmatpush1.bf16.msra.mxu0 %v1299
    %1589 = vmatprep.subr.bf16.mxu0 %v1295
    %1590 = vmatpush1.bf16.msra.mxu0 %v1294
    %1591 = vmatprep.subr.bf16.mxu0 0
    %1592 = vmatpush2.bf16.msra.mxu0 0
    %1593 = vmatprep.subr.bf16.mxu0 0
    %1594 = vmatpush2.bf16.msra.mxu0 0
    %1595 = vmatprep.subr.bf16.mxu0 0
    %1596 = vmatpush2.bf16.msra.mxu0 0
    %1597 = vmatprep.subr.bf16.mxu0 0
    %1598 = vmatpush2.bf16.msra.mxu0 0
    %1599 = vmatprep.subr.bf16.mxu0 0
    %1600 = vmatpush2.bf16.msra.mxu0 0
    %1601 = vmatprep.subr.bf16.mxu0 0
    %1602 = vmatpush2.bf16.msra.mxu0 0
    %1603 = vmatprep.subr.bf16.mxu0 0
    %1604 = vmatpush2.bf16.msra.mxu0 0
    %1605 = vmatprep.subr.bf16.mxu0 0
    %1606 = vmatpush2.bf16.msra.mxu0 0
    %1607 = vmatprep.mubr.bf16.mxu0 0
    %1608 = vmatmul.mubr.bf16.gmra.mxu0 %v656
    %v1609 = vpop.f32.mrf.mxu0
    %v1610 = vadd.f32 %v1569, %v1609
    %v1611 = vpop.f32.mrf.mxu0
    %v1612 = vadd.f32 %v1571, %v1611
    %v1613 = vpop.f32.mrf.mxu0
    %v1614 = vpop.f32.mrf.mxu0
    %1615 = vdwg.mxu0
    %1616 = vmatprep.subr.bf16.mxu0 0
    %1617 = vmatpush1.bf16.msra.mxu0 %v1251
    %1618 = vmatprep.subr.bf16.mxu0 0
    %1619 = vmatpush1.bf16.msra.mxu0 %v1246
    %1620 = vmatprep.subr.bf16.mxu0 0
    %1621 = vmatpush1.bf16.msra.mxu0 %v1241
    %1622 = vmatprep.subr.bf16.mxu0 0
    %1623 = vmatpush1.bf16.msra.mxu0 %v1236
    %1624 = vmatprep.subr.bf16.mxu0 0
    %1625 = vmatpush1.bf16.msra.mxu0 %v1231
    %1626 = vmatprep.subr.bf16.mxu0 0
    %1627 = vmatpush1.bf16.msra.mxu0 %v1226
    %1628 = vmatprep.subr.bf16.mxu0 0
    %1629 = vmatpush1.bf16.msra.mxu0 %v1221
    %1630 = vmatprep.subr.bf16.mxu0 0
    %1631 = vmatpush1.bf16.msra.mxu0 %v1216
    %1632 = vmatprep.subr.bf16.mxu0 0
    %1633 = vmatpush2.bf16.msra.mxu0 %v1291
    %1634 = vmatprep.subr.bf16.mxu0 0
    %1635 = vmatpush2.bf16.msra.mxu0 %v1286
    %1636 = vmatprep.subr.bf16.mxu0 0
    %1637 = vmatpush2.bf16.msra.mxu0 %v1281
    %1638 = vmatprep.subr.bf16.mxu0 0
    %1639 = vmatpush2.bf16.msra.mxu0 %v1276
    %1640 = vmatprep.subr.bf16.mxu0 0
    %1641 = vmatpush2.bf16.msra.mxu0 %v1271
    %1642 = vmatprep.subr.bf16.mxu0 0
    %1643 = vmatpush2.bf16.msra.mxu0 %v1266
    %1644 = vmatprep.subr.bf16.mxu0 0
    %1645 = vmatpush2.bf16.msra.mxu0 %v1261
    %1646 = vmatprep.subr.bf16.mxu0 0
    %1647 = vmatpush2.bf16.msra.mxu0 %v1256
    %1648 = vmatprep.mubr.bf16.mxu0 %v655
    %1649 = vmatmul.mubr.bf16.gmra.mxu0 %v654
    %v1650 = vpop.f32.mrf.mxu0
    %v1651 = vadd.f32 %v822, %v1650
    %v1652 = vpop.f32.mrf.mxu0
    %v1653 = vpop.f32.mrf.mxu0
    %v1654 = vpop.f32.mrf.mxu0
    %1655 = vdwg.mxu0
    %1656 = vmatprep.subr.bf16.mxu0 0
    %1657 = vmatpush1.bf16.msra.mxu0 %v1331
    %1658 = vmatprep.subr.bf16.mxu0 0
    %1659 = vmatpush1.bf16.msra.mxu0 %v1326
    %1660 = vmatprep.subr.bf16.mxu0 0
    %1661 = vmatpush1.bf16.msra.mxu0 %v1321
    %1662 = vmatprep.subr.bf16.mxu0 0
    %1663 = vmatpush1.bf16.msra.mxu0 %v1316
    %1664 = vmatprep.subr.bf16.mxu0 0
    %1665 = vmatpush1.bf16.msra.mxu0 %v1311
    %1666 = vmatprep.subr.bf16.mxu0 0
    %1667 = vmatpush1.bf16.msra.mxu0 %v1306
    %1668 = vmatprep.subr.bf16.mxu0 0
    %1669 = vmatpush1.bf16.msra.mxu0 %v1301
    %1670 = vmatprep.subr.bf16.mxu0 0
    %1671 = vmatpush1.bf16.msra.mxu0 %v1296
    %1672 = vmatprep.subr.bf16.mxu0 0
    %1673 = vmatpush2.bf16.msra.mxu0 0
    %1674 = vmatprep.subr.bf16.mxu0 0
    %1675 = vmatpush2.bf16.msra.mxu0 0
    %1676 = vmatprep.subr.bf16.mxu0 0
    %1677 = vmatpush2.bf16.msra.mxu0 0
    %1678 = vmatprep.subr.bf16.mxu0 0
    %1679 = vmatpush2.bf16.msra.mxu0 0
    %1680 = vmatprep.subr.bf16.mxu0 0
    %1681 = vmatpush2.bf16.msra.mxu0 0
    %1682 = vmatprep.subr.bf16.mxu0 0
    %1683 = vmatpush2.bf16.msra.mxu0 0
    %1684 = vmatprep.subr.bf16.mxu0 0
    %1685 = vmatpush2.bf16.msra.mxu0 0
    %1686 = vmatprep.subr.bf16.mxu0 0
    %1687 = vmatpush2.bf16.msra.mxu0 0
    %1688 = vmatprep.mubr.bf16.mxu0 0
    %1689 = vmatmul.mubr.bf16.gmra.mxu0 %v656
    %v1690 = vpop.f32.mrf.mxu0
    %v1691 = vadd.f32 %v1651, %v1690
    %v1692 = vpop.f32.mrf.mxu0
    %v1693 = vpop.f32.mrf.mxu0
    %v1694 = vpop.f32.mrf.mxu0
    %1695 = vdwg.mxu0
    %v1696 = vmax.f32 %v1528, 0.0
    %v1697 = vmax.f32 %v1530, 0.0
    %v1698 = vmax.f32 %v1610, 0.0
    %v1699 = vmax.f32 %v1612, 0.0
    %v1700 = vmax.f32 %v1691, 0.0
    %v1701 = vpack.c.bf16 %v1696, %v1696
    %v1702 = vpack.c.bf16 %v1697, %v1697
    %v1703 = vpack.c.bf16 %v1698, %v1698
    %v1704 = vpack.c.bf16 %v1699, %v1699
    %v1705 = vpack.c.bf16 %v1700, %v1700
    %v1706 = vld [vmem:[#allocation7] sm:$0xff]
    %v1707 = vld [vmem:[#allocation7 + $0x8] sm:$0xff]
    %v1708 = vld [vmem:[#allocation7 + $0x10] sm:$0xff]
    %v1709 = vld [vmem:[#allocation7 + $0x18] sm:$0xff]
    %v1710 = vld [vmem:[#allocation7 + $0x20] sm:$0xff]
    %v1711 = vld [vmem:[#allocation7 + $0x28] sm:$0xff]
    %v1712 = vld [vmem:[#allocation7 + $0x30] sm:$0xff]
    %v1713 = vld [vmem:[#allocation7 + $0x38] sm:$0xff]
    %v1714 = vld [vmem:[#allocation7 + $0x40] sm:$0xff]
    %v1715 = vld [vmem:[#allocation7 + $0x48] sm:$0xff]
    %v1716 = vld [vmem:[#allocation7 + $0x50] sm:$0xff]
    %v1717 = vld [vmem:[#allocation7 + $0x58] sm:$0xff]
    %v1718 = vld [vmem:[#allocation7 + $0x60] sm:$0xff]
    %v1719 = vld [vmem:[#allocation7 + $0x68] sm:$0xff]
    %v1720 = vld [vmem:[#allocation7 + $0x70] sm:$0xff]
    %v1721 = vld [vmem:[#allocation7 + $0x78] sm:$0xff]
    %v1722 = vld [vmem:[#allocation7 + $0x80] sm:$0xff]
    %v1723 = vld [vmem:[#allocation7 + $0x88] sm:$0xff]
    %v1724 = vld [vmem:[#allocation7 + $0x90] sm:$0xff]
    %v1725 = vld [vmem:[#allocation7 + $0x98] sm:$0xff]
    %v1726 = vld [vmem:[#allocation7 + $0xa0] sm:$0xff]
    %v1727 = vld [vmem:[#allocation7 + $0xa8] sm:$0xff]
    %v1728 = vld [vmem:[#allocation7 + $0xb0] sm:$0xff]
    %v1729 = vld [vmem:[#allocation7 + $0xb8] sm:$0xff]
    %v1730 = vld [vmem:[#allocation7 + $0xc0] sm:$0xff]
    %v1731 = vld [vmem:[#allocation7 + $0xc8] sm:$0xff]
    %v1732 = vld [vmem:[#allocation7 + $0xd0] sm:$0xff]
    %v1733 = vld [vmem:[#allocation7 + $0xd8] sm:$0xff]
    %v1734 = vld [vmem:[#allocation7 + $0xe0] sm:$0xff]
    %v1735 = vld [vmem:[#allocation7 + $0xe8] sm:$0xff]
    %v1736 = vld [vmem:[#allocation7 + $0xf0] sm:$0xff]
    %v1737 = vld [vmem:[#allocation7 + $0xf8] sm:$0xff]
    %v1738 = vld [vmem:[#allocation7 + $0x100] sm:$0xff]
    %v1739 = vld [vmem:[#allocation7 + $0x108] sm:$0xff]
    %v1740 = vld [vmem:[#allocation7 + $0x110] sm:$0xff]
    %v1741 = vld [vmem:[#allocation7 + $0x118] sm:$0xff]
    %v1742 = vld [vmem:[#allocation7 + $0x120] sm:$0xff]
    %v1743 = vld [vmem:[#allocation7 + $0x128] sm:$0xff]
    %v1744 = vld [vmem:[#allocation7 + $0x130] sm:$0xff]
    %v1745 = vld [vmem:[#allocation7 + $0x138] sm:$0xff]
    %v1746 = vld [vmem:[#allocation7 + $0x140] sm:$0xff]
    %v1747 = vld [vmem:[#allocation7 + $0x148] sm:$0xff]
    %v1748 = vld [vmem:[#allocation7 + $0x150] sm:$0xff]
    %v1749 = vld [vmem:[#allocation7 + $0x158] sm:$0xff]
    %v1750 = vld [vmem:[#allocation7 + $0x160] sm:$0xff]
    %v1751 = vld [vmem:[#allocation7 + $0x168] sm:$0xff]
    %v1752 = vld [vmem:[#allocation7 + $0x170] sm:$0xff]
    %v1753 = vld [vmem:[#allocation7 + $0x178] sm:$0xff]
    %v1754 = vld [vmem:[#allocation7 + $0x180] sm:$0xff]
    %v1755 = vld [vmem:[#allocation7 + $0x188] sm:$0xff]
    %v1756 = vld [vmem:[#allocation7 + $0x190] sm:$0xff]
    %v1757 = vld [vmem:[#allocation7 + $0x198] sm:$0xff]
    %v1758 = vld [vmem:[#allocation7 + $0x1a0] sm:$0xff]
    %v1759 = vld [vmem:[#allocation7 + $0x1a8] sm:$0xff]
    %v1760 = vld [vmem:[#allocation7 + $0x1b0] sm:$0xff]
    %v1761 = vld [vmem:[#allocation7 + $0x1b8] sm:$0xff]
    %v1762 = vld [vmem:[#allocation7 + $0x1c0] sm:$0xff]
    %v1763 = vld [vmem:[#allocation7 + $0x1c8] sm:$0xff]
    %v1764 = vld [vmem:[#allocation7 + $0x1d0] sm:$0xff]
    %v1765 = vld [vmem:[#allocation7 + $0x1d8] sm:$0xff]
    %v1766 = vld [vmem:[#allocation7 + $0x1e0] sm:$0xff]
    %v1767 = vld [vmem:[#allocation7 + $0x1e8] sm:$0xff]
    %v1768 = vld [vmem:[#allocation7 + $0x1f0] sm:$0xff]
    %v1769 = vld [vmem:[#allocation7 + $0x1f8] sm:$0xff]
    %v1770 = vld [vmem:[#allocation7 + $0x200] sm:$0xff]
    %v1771 = vld [vmem:[#allocation7 + $0x208] sm:$0xff]
    %v1772 = vld [vmem:[#allocation7 + $0x210] sm:$0xff]
    %v1773 = vld [vmem:[#allocation7 + $0x218] sm:$0xff]
    %v1774 = vld [vmem:[#allocation7 + $0x220] sm:$0xff]
    %v1775 = vld [vmem:[#allocation7 + $0x228] sm:$0xff]
    %v1776 = vld [vmem:[#allocation7 + $0x230] sm:$0xff]
    %v1777 = vld [vmem:[#allocation7 + $0x238] sm:$0xff]
    %v1778 = vld [vmem:[#allocation7 + $0x240] sm:$0xff]
    %v1779 = vld [vmem:[#allocation7 + $0x248] sm:$0xff]
    %v1780 = vld [vmem:[#allocation7 + $0x250] sm:$0xff]
    %v1781 = vld [vmem:[#allocation7 + $0x258] sm:$0xff]
    %v1782 = vld [vmem:[#allocation7 + $0x260] sm:$0xff]
    %v1783 = vld [vmem:[#allocation7 + $0x268] sm:$0xff]
    %v1784 = vld [vmem:[#allocation7 + $0x270] sm:$0xff]
    %v1785 = vld [vmem:[#allocation7 + $0x278] sm:$0xff]
    %v1786 = vld [vmem:[%s5 + $0xa] sm:$0x3]
    %v1788 = vlaneseq
    %v1789 = vshrl.u32 %v1788, 7
    %v1790 = vsub.s32 0, %v1789
    %v1791 = vrot.slane %v1786, %v1790
    %v1792 = vlaneseq
    %v1793 = vshrl.u32 %v1792, 7
    %v1794 = vsub.s32 1, %v1793
    %v1795 = vrot.slane %v1786, %v1794
    %v1878 = vunpack.c.l.b16 %v1706
    %v1879 = vunpack.c.h.b16 %v1706
    %v1880 = vunpack.c.l.b16 %v1707
    %v1881 = vunpack.c.h.b16 %v1707
    %v1882 = vunpack.c.l.b16 %v1708
    %v1883 = vunpack.c.h.b16 %v1708
    %v1884 = vunpack.c.l.b16 %v1709
    %v1885 = vunpack.c.h.b16 %v1709
    %v1886 = vunpack.c.l.b16 %v1710
    %v1887 = vunpack.c.h.b16 %v1710
    %v1888 = vunpack.c.l.b16 %v1711
    %v1889 = vunpack.c.h.b16 %v1711
    %v1890 = vunpack.c.l.b16 %v1712
    %v1891 = vunpack.c.h.b16 %v1712
    %v1892 = vunpack.c.l.b16 %v1713
    %v1893 = vunpack.c.h.b16 %v1713
    %v1894 = vunpack.c.l.b16 %v1714
    %v1895 = vunpack.c.h.b16 %v1714
    %v1896 = vunpack.c.l.b16 %v1715
    %v1897 = vunpack.c.h.b16 %v1715
    %v1898 = vunpack.c.l.b16 %v1716
    %v1899 = vunpack.c.h.b16 %v1716
    %v1900 = vunpack.c.l.b16 %v1717
    %v1901 = vunpack.c.h.b16 %v1717
    %v1902 = vunpack.c.l.b16 %v1718
    %v1903 = vunpack.c.h.b16 %v1718
    %v1904 = vunpack.c.l.b16 %v1719
    %v1905 = vunpack.c.h.b16 %v1719
    %v1906 = vunpack.c.l.b16 %v1720
    %v1907 = vunpack.c.h.b16 %v1720
    %v1908 = vunpack.c.l.b16 %v1721
    %v1909 = vunpack.c.h.b16 %v1721
    %v1910 = vunpack.c.l.b16 %v1722
    %v1911 = vunpack.c.h.b16 %v1722
    %v1912 = vunpack.c.l.b16 %v1723
    %v1913 = vunpack.c.h.b16 %v1723
    %v1914 = vunpack.c.l.b16 %v1724
    %v1915 = vunpack.c.h.b16 %v1724
    %v1916 = vunpack.c.l.b16 %v1725
    %v1917 = vunpack.c.h.b16 %v1725
    %v1918 = vunpack.c.l.b16 %v1726
    %v1919 = vunpack.c.h.b16 %v1726
    %v1920 = vunpack.c.l.b16 %v1727
    %v1921 = vunpack.c.h.b16 %v1727
    %v1922 = vunpack.c.l.b16 %v1728
    %v1923 = vunpack.c.h.b16 %v1728
    %v1924 = vunpack.c.l.b16 %v1729
    %v1925 = vunpack.c.h.b16 %v1729
    %v1926 = vunpack.c.l.b16 %v1730
    %v1927 = vunpack.c.h.b16 %v1730
    %v1928 = vunpack.c.l.b16 %v1731
    %v1929 = vunpack.c.h.b16 %v1731
    %v1930 = vunpack.c.l.b16 %v1732
    %v1931 = vunpack.c.h.b16 %v1732
    %v1932 = vunpack.c.l.b16 %v1733
    %v1933 = vunpack.c.h.b16 %v1733
    %v1934 = vunpack.c.l.b16 %v1734
    %v1935 = vunpack.c.h.b16 %v1734
    %v1936 = vunpack.c.l.b16 %v1735
    %v1937 = vunpack.c.h.b16 %v1735
    %v1938 = vunpack.c.l.b16 %v1736
    %v1939 = vunpack.c.h.b16 %v1736
    %v1940 = vunpack.c.l.b16 %v1737
    %v1941 = vunpack.c.h.b16 %v1737
    %v1942 = vunpack.c.l.b16 %v1738
    %v1943 = vunpack.c.h.b16 %v1738
    %v1944 = vunpack.c.l.b16 %v1739
    %v1945 = vunpack.c.h.b16 %v1739
    %v1946 = vunpack.c.l.b16 %v1740
    %v1947 = vunpack.c.h.b16 %v1740
    %v1948 = vunpack.c.l.b16 %v1741
    %v1949 = vunpack.c.h.b16 %v1741
    %v1950 = vunpack.c.l.b16 %v1742
    %v1951 = vunpack.c.h.b16 %v1742
    %v1952 = vunpack.c.l.b16 %v1743
    %v1953 = vunpack.c.h.b16 %v1743
    %v1954 = vunpack.c.l.b16 %v1744
    %v1955 = vunpack.c.h.b16 %v1744
    %v1956 = vunpack.c.l.b16 %v1745
    %v1957 = vunpack.c.h.b16 %v1745
    %v1958 = vunpack.c.l.b16 %v1746
    %v1959 = vunpack.c.h.b16 %v1746
    %v1960 = vunpack.c.l.b16 %v1747
    %v1961 = vunpack.c.h.b16 %v1747
    %v1962 = vunpack.c.l.b16 %v1748
    %v1963 = vunpack.c.h.b16 %v1748
    %v1964 = vunpack.c.l.b16 %v1749
    %v1965 = vunpack.c.h.b16 %v1749
    %v1966 = vunpack.c.l.b16 %v1750
    %v1967 = vunpack.c.h.b16 %v1750
    %v1968 = vunpack.c.l.b16 %v1751
    %v1969 = vunpack.c.h.b16 %v1751
    %v1970 = vunpack.c.l.b16 %v1752
    %v1971 = vunpack.c.h.b16 %v1752
    %v1972 = vunpack.c.l.b16 %v1753
    %v1973 = vunpack.c.h.b16 %v1753
    %v1974 = vunpack.c.l.b16 %v1754
    %v1975 = vunpack.c.h.b16 %v1754
    %v1976 = vunpack.c.l.b16 %v1755
    %v1977 = vunpack.c.h.b16 %v1755
    %v1978 = vunpack.c.l.b16 %v1756
    %v1979 = vunpack.c.h.b16 %v1756
    %v1980 = vunpack.c.l.b16 %v1757
    %v1981 = vunpack.c.h.b16 %v1757
    %v1982 = vunpack.c.l.b16 %v1758
    %v1983 = vunpack.c.h.b16 %v1758
    %v1984 = vunpack.c.l.b16 %v1759
    %v1985 = vunpack.c.h.b16 %v1759
    %v1986 = vunpack.c.l.b16 %v1760
    %v1987 = vunpack.c.h.b16 %v1760
    %v1988 = vunpack.c.l.b16 %v1761
    %v1989 = vunpack.c.h.b16 %v1761
    %v1990 = vunpack.c.l.b16 %v1762
    %v1991 = vunpack.c.h.b16 %v1762
    %v1992 = vunpack.c.l.b16 %v1763
    %v1993 = vunpack.c.h.b16 %v1763
    %v1994 = vunpack.c.l.b16 %v1764
    %v1995 = vunpack.c.h.b16 %v1764
    %v1996 = vunpack.c.l.b16 %v1765
    %v1997 = vunpack.c.h.b16 %v1765
    %v1998 = vunpack.c.l.b16 %v1766
    %v1999 = vunpack.c.h.b16 %v1766
    %v2000 = vunpack.c.l.b16 %v1767
    %v2001 = vunpack.c.h.b16 %v1767
    %v2002 = vunpack.c.l.b16 %v1768
    %v2003 = vunpack.c.h.b16 %v1768
    %v2004 = vunpack.c.l.b16 %v1769
    %v2005 = vunpack.c.h.b16 %v1769
    %v2006 = vunpack.c.l.b16 %v1770
    %v2007 = vunpack.c.h.b16 %v1770
    %v2008 = vunpack.c.l.b16 %v1771
    %v2009 = vunpack.c.h.b16 %v1771
    %v2010 = vunpack.c.l.b16 %v1772
    %v2011 = vunpack.c.h.b16 %v1772
    %v2012 = vunpack.c.l.b16 %v1773
    %v2013 = vunpack.c.h.b16 %v1773
    %v2014 = vunpack.c.l.b16 %v1774
    %v2015 = vunpack.c.h.b16 %v1774
    %v2016 = vunpack.c.l.b16 %v1775
    %v2017 = vunpack.c.h.b16 %v1775
    %v2018 = vunpack.c.l.b16 %v1776
    %v2019 = vunpack.c.h.b16 %v1776
    %v2020 = vunpack.c.l.b16 %v1777
    %v2021 = vunpack.c.h.b16 %v1777
    %v2022 = vunpack.c.l.b16 %v1778
    %v2023 = vunpack.c.h.b16 %v1778
    %v2024 = vunpack.c.l.b16 %v1779
    %v2025 = vunpack.c.h.b16 %v1779
    %v2026 = vunpack.c.l.b16 %v1780
    %v2027 = vunpack.c.h.b16 %v1780
    %v2028 = vunpack.c.l.b16 %v1781
    %v2029 = vunpack.c.h.b16 %v1781
    %v2030 = vunpack.c.l.b16 %v1782
    %v2031 = vunpack.c.h.b16 %v1782
    %v2032 = vunpack.c.l.b16 %v1783
    %v2033 = vunpack.c.h.b16 %v1783
    %v2034 = vunpack.c.l.b16 %v1784
    %v2035 = vunpack.c.h.b16 %v1784
    %v2036 = vunpack.c.l.b16 %v1785
    %v2037 = vunpack.c.h.b16 %v1785
    %v2038 = vpack.c.b16 %v1880, %v1878
    %v2039 = vpack.c.b16 %v1881, %v1879
    %v2040 = vpack.c.b16 %v1884, %v1882
    %v2041 = vpack.c.b16 %v1885, %v1883
    %v2042 = vpack.c.b16 %v1888, %v1886
    %v2043 = vpack.c.b16 %v1889, %v1887
    %v2044 = vpack.c.b16 %v1892, %v1890
    %v2045 = vpack.c.b16 %v1893, %v1891
    %v2046 = vpack.c.b16 %v1896, %v1894
    %v2047 = vpack.c.b16 %v1897, %v1895
    %v2048 = vpack.c.b16 %v1900, %v1898
    %v2049 = vpack.c.b16 %v1901, %v1899
    %v2050 = vpack.c.b16 %v1904, %v1902
    %v2051 = vpack.c.b16 %v1905, %v1903
    %v2052 = vpack.c.b16 %v1908, %v1906
    %v2053 = vpack.c.b16 %v1909, %v1907
    %v2054 = vpack.c.b16 %v1912, %v1910
    %v2055 = vpack.c.b16 %v1913, %v1911
    %v2056 = vpack.c.b16 %v1916, %v1914
    %v2057 = vpack.c.b16 %v1917, %v1915
    %v2058 = vpack.c.b16 %v1920, %v1918
    %v2059 = vpack.c.b16 %v1921, %v1919
    %v2060 = vpack.c.b16 %v1924, %v1922
    %v2061 = vpack.c.b16 %v1925, %v1923
    %v2062 = vpack.c.b16 %v1928, %v1926
    %v2063 = vpack.c.b16 %v1929, %v1927
    %v2064 = vpack.c.b16 %v1932, %v1930
    %v2065 = vpack.c.b16 %v1933, %v1931
    %v2066 = vpack.c.b16 %v1936, %v1934
    %v2067 = vpack.c.b16 %v1937, %v1935
    %v2068 = vpack.c.b16 %v1940, %v1938
    %v2069 = vpack.c.b16 %v1941, %v1939
    %v2070 = vpack.c.b16 %v1944, %v1942
    %v2071 = vpack.c.b16 %v1945, %v1943
    %v2072 = vpack.c.b16 %v1948, %v1946
    %v2073 = vpack.c.b16 %v1949, %v1947
    %v2074 = vpack.c.b16 %v1952, %v1950
    %v2075 = vpack.c.b16 %v1953, %v1951
    %v2076 = vpack.c.b16 %v1956, %v1954
    %v2077 = vpack.c.b16 %v1957, %v1955
    %v2078 = vpack.c.b16 %v1960, %v1958
    %v2079 = vpack.c.b16 %v1961, %v1959
    %v2080 = vpack.c.b16 %v1964, %v1962
    %v2081 = vpack.c.b16 %v1965, %v1963
    %v2082 = vpack.c.b16 %v1968, %v1966
    %v2083 = vpack.c.b16 %v1969, %v1967
    %v2084 = vpack.c.b16 %v1972, %v1970
    %v2085 = vpack.c.b16 %v1973, %v1971
    %v2086 = vpack.c.b16 %v1976, %v1974
    %v2087 = vpack.c.b16 %v1977, %v1975
    %v2088 = vpack.c.b16 %v1980, %v1978
    %v2089 = vpack.c.b16 %v1981, %v1979
    %v2090 = vpack.c.b16 %v1984, %v1982
    %v2091 = vpack.c.b16 %v1985, %v1983
    %v2092 = vpack.c.b16 %v1988, %v1986
    %v2093 = vpack.c.b16 %v1989, %v1987
    %v2094 = vpack.c.b16 %v1992, %v1990
    %v2095 = vpack.c.b16 %v1993, %v1991
    %v2096 = vpack.c.b16 %v1996, %v1994
    %v2097 = vpack.c.b16 %v1997, %v1995
    %v2098 = vpack.c.b16 %v2000, %v1998
    %v2099 = vpack.c.b16 %v2001, %v1999
    %v2100 = vpack.c.b16 %v2004, %v2002
    %v2101 = vpack.c.b16 %v2005, %v2003
    %v2102 = vpack.c.b16 %v2008, %v2006
    %v2103 = vpack.c.b16 %v2009, %v2007
    %v2104 = vpack.c.b16 %v2012, %v2010
    %v2105 = vpack.c.b16 %v2013, %v2011
    %v2106 = vpack.c.b16 %v2016, %v2014
    %v2107 = vpack.c.b16 %v2017, %v2015
    %v2108 = vpack.c.b16 %v2020, %v2018
    %v2109 = vpack.c.b16 %v2021, %v2019
    %v2110 = vpack.c.b16 %v2024, %v2022
    %v2111 = vpack.c.b16 %v2025, %v2023
    %v2112 = vpack.c.b16 %v2028, %v2026
    %v2113 = vpack.c.b16 %v2029, %v2027
    %v2114 = vpack.c.b16 %v2032, %v2030
    %v2115 = vpack.c.b16 %v2033, %v2031
    %v2116 = vpack.c.b16 %v2036, %v2034
    %v2117 = vpack.c.b16 %v2037, %v2035
    %2198 = vmatprep.subr.bf16.mxu0 %v2053
    %2199 = vmatpush1.bf16.msra.mxu0 %v2052
    %2200 = vmatprep.subr.bf16.mxu0 %v2051
    %2201 = vmatpush1.bf16.msra.mxu0 %v2050
    %2202 = vmatprep.subr.bf16.mxu0 %v2049
    %2203 = vmatpush1.bf16.msra.mxu0 %v2048
    %2204 = vmatprep.subr.bf16.mxu0 %v2047
    %2205 = vmatpush1.bf16.msra.mxu0 %v2046
    %2206 = vmatprep.subr.bf16.mxu0 %v2045
    %2207 = vmatpush1.bf16.msra.mxu0 %v2044
    %2208 = vmatprep.subr.bf16.mxu0 %v2043
    %2209 = vmatpush1.bf16.msra.mxu0 %v2042
    %2210 = vmatprep.subr.bf16.mxu0 %v2041
    %2211 = vmatpush1.bf16.msra.mxu0 %v2040
    %2212 = vmatprep.subr.bf16.mxu0 %v2039
    %2213 = vmatpush1.bf16.msra.mxu0 %v2038
    %2214 = vmatprep.subr.bf16.mxu0 %v2069
    %2215 = vmatpush2.bf16.msra.mxu0 %v2068
    %2216 = vmatprep.subr.bf16.mxu0 %v2067
    %2217 = vmatpush2.bf16.msra.mxu0 %v2066
    %2218 = vmatprep.subr.bf16.mxu0 %v2065
    %2219 = vmatpush2.bf16.msra.mxu0 %v2064
    %2220 = vmatprep.subr.bf16.mxu0 %v2063
    %2221 = vmatpush2.bf16.msra.mxu0 %v2062
    %2222 = vmatprep.subr.bf16.mxu0 %v2061
    %2223 = vmatpush2.bf16.msra.mxu0 %v2060
    %2224 = vmatprep.subr.bf16.mxu0 %v2059
    %2225 = vmatpush2.bf16.msra.mxu0 %v2058
    %2226 = vmatprep.subr.bf16.mxu0 %v2057
    %2227 = vmatpush2.bf16.msra.mxu0 %v2056
    %2228 = vmatprep.subr.bf16.mxu0 %v2055
    %2229 = vmatpush2.bf16.msra.mxu0 %v2054
    %2230 = vmatprep.mubr.bf16.mxu0 %v1702
    %2231 = vmatmul.mubr.bf16.gmra.mxu0 %v1701
    %v2232 = vpop.f32.mrf.mxu0
    %v2233 = vadd.f32 %v1791, %v2232
    %v2234 = vpop.f32.mrf.mxu0
    %v2235 = vadd.f32 %v1795, %v2234
    %v2236 = vpop.f32.mrf.mxu0
    %v2237 = vpop.f32.mrf.mxu0
    %2238 = vdwg.mxu0
    %2239 = vmatprep.subr.bf16.mxu0 %v2085
    %2240 = vmatpush1.bf16.msra.mxu0 %v2084
    %2241 = vmatprep.subr.bf16.mxu0 %v2083
    %2242 = vmatpush1.bf16.msra.mxu0 %v2082
    %2243 = vmatprep.subr.bf16.mxu0 %v2081
    %2244 = vmatpush1.bf16.msra.mxu0 %v2080
    %2245 = vmatprep.subr.bf16.mxu0 %v2079
    %2246 = vmatpush1.bf16.msra.mxu0 %v2078
    %2247 = vmatprep.subr.bf16.mxu0 %v2077
    %2248 = vmatpush1.bf16.msra.mxu0 %v2076
    %2249 = vmatprep.subr.bf16.mxu0 %v2075
    %2250 = vmatpush1.bf16.msra.mxu0 %v2074
    %2251 = vmatprep.subr.bf16.mxu0 %v2073
    %2252 = vmatpush1.bf16.msra.mxu0 %v2072
    %2253 = vmatprep.subr.bf16.mxu0 %v2071
    %2254 = vmatpush1.bf16.msra.mxu0 %v2070
    %2255 = vmatprep.subr.bf16.mxu0 %v2101
    %2256 = vmatpush2.bf16.msra.mxu0 %v2100
    %2257 = vmatprep.subr.bf16.mxu0 %v2099
    %2258 = vmatpush2.bf16.msra.mxu0 %v2098
    %2259 = vmatprep.subr.bf16.mxu0 %v2097
    %2260 = vmatpush2.bf16.msra.mxu0 %v2096
    %2261 = vmatprep.subr.bf16.mxu0 %v2095
    %2262 = vmatpush2.bf16.msra.mxu0 %v2094
    %2263 = vmatprep.subr.bf16.mxu0 %v2093
    %2264 = vmatpush2.bf16.msra.mxu0 %v2092
    %2265 = vmatprep.subr.bf16.mxu0 %v2091
    %2266 = vmatpush2.bf16.msra.mxu0 %v2090
    %2267 = vmatprep.subr.bf16.mxu0 %v2089
    %2268 = vmatpush2.bf16.msra.mxu0 %v2088
    %2269 = vmatprep.subr.bf16.mxu0 %v2087
    %2270 = vmatpush2.bf16.msra.mxu0 %v2086
    %2271 = vmatprep.mubr.bf16.mxu0 %v1704
    %2272 = vmatmul.mubr.bf16.gmra.mxu0 %v1703
    %v2273 = vpop.f32.mrf.mxu0
    %v2274 = vadd.f32 %v2233, %v2273
    %v2275 = vpop.f32.mrf.mxu0
    %v2276 = vadd.f32 %v2235, %v2275
    %v2277 = vpop.f32.mrf.mxu0
    %v2278 = vpop.f32.mrf.mxu0
    %2279 = vdwg.mxu0
    %2280 = vmatprep.subr.bf16.mxu0 %v2117
    %2281 = vmatpush1.bf16.msra.mxu0 %v2116
    %2282 = vmatprep.subr.bf16.mxu0 %v2115
    %2283 = vmatpush1.bf16.msra.mxu0 %v2114
    %2284 = vmatprep.subr.bf16.mxu0 %v2113
    %2285 = vmatpush1.bf16.msra.mxu0 %v2112
    %2286 = vmatprep.subr.bf16.mxu0 %v2111
    %2287 = vmatpush1.bf16.msra.mxu0 %v2110
    %2288 = vmatprep.subr.bf16.mxu0 %v2109
    %2289 = vmatpush1.bf16.msra.mxu0 %v2108
    %2290 = vmatprep.subr.bf16.mxu0 %v2107
    %2291 = vmatpush1.bf16.msra.mxu0 %v2106
    %2292 = vmatprep.subr.bf16.mxu0 %v2105
    %2293 = vmatpush1.bf16.msra.mxu0 %v2104
    %2294 = vmatprep.subr.bf16.mxu0 %v2103
    %2295 = vmatpush1.bf16.msra.mxu0 %v2102
    %2296 = vmatprep.subr.bf16.mxu0 0
    %2297 = vmatpush2.bf16.msra.mxu0 0
    %2298 = vmatprep.subr.bf16.mxu0 0
    %2299 = vmatpush2.bf16.msra.mxu0 0
    %2300 = vmatprep.subr.bf16.mxu0 0
    %2301 = vmatpush2.bf16.msra.mxu0 0
    %2302 = vmatprep.subr.bf16.mxu0 0
    %2303 = vmatpush2.bf16.msra.mxu0 0
    %2304 = vmatprep.subr.bf16.mxu0 0
    %2305 = vmatpush2.bf16.msra.mxu0 0
    %2306 = vmatprep.subr.bf16.mxu0 0
    %2307 = vmatpush2.bf16.msra.mxu0 0
    %2308 = vmatprep.subr.bf16.mxu0 0
    %2309 = vmatpush2.bf16.msra.mxu0 0
    %2310 = vmatprep.subr.bf16.mxu0 0
    %2311 = vmatpush2.bf16.msra.mxu0 0
    %2312 = vmatprep.mubr.bf16.mxu0 0
    %2313 = vmatmul.mubr.bf16.gmra.mxu0 %v1705
    %v2314 = vpop.f32.mrf.mxu0
    %v2315 = vadd.f32 %v2274, %v2314
    %v2316 = vpop.f32.mrf.mxu0
    %v2317 = vadd.f32 %v2276, %v2316
    %v2318 = vpop.f32.mrf.mxu0
    %v2319 = vpop.f32.mrf.mxu0
    %2320 = vdwg.mxu0
    %v2321 = vmax.f32 %v2315, 0.0
    %v2322 = vmax.f32 %v2317, 0.0
    %v2323 = vld [vmem:[%s5 + $0xc] sm:$0x3]
    %v2325 = vlaneseq
    %v2326 = vshrl.u32 %v2325, 7
    %v2327 = vsub.s32 0, %v2326
    %v2328 = vrot.slane %v2323, %v2327
    %v2329 = vlaneseq
    %v2330 = vshrl.u32 %v2329, 7
    %v2331 = vsub.s32 1, %v2330
    %v2332 = vrot.slane %v2323, %v2331
    %v2335 = vpack.c.bf16 %v2328, %v2328
    %v2336 = vpack.c.bf16 %v2332, %v2332
    %v2337 = vpack.c.bf16 %v2321, %v2321
    %v2338 = vpack.c.bf16 %v2322, %v2322
    %v2339 = vld [vmem:[%s5 + $0xe] sm:$0x1]
    %2341 = vset.pattern.permute.xlu0 0
    %2342 = vperm.xlu0 %2341, %v2339
    %v2343 = vpop.permute.xlu0 %2342
    %v2345 = vlaneseq
    %v2346 = vshrl.u32 %v2345, 7
    %v2347 = vsub.s32 0, %v2346
    %v2348 = vrot.slane %v2343, %v2347
    %2349 = vmatprep.subr.bf16.mxu0 0
    %2350 = vmatpush1.bf16.xpose.msra.mxu0 0
    %2351 = vmatprep.subr.bf16.mxu0 0
    %2352 = vmatpush1.bf16.xpose.msra.mxu0 0
    %2353 = vmatprep.subr.bf16.mxu0 0
    %2354 = vmatpush1.bf16.xpose.msra.mxu0 0
    %2355 = vmatprep.subr.bf16.mxu0 0
    %2356 = vmatpush1.bf16.xpose.msra.mxu0 0
    %2357 = vmatprep.subr.bf16.mxu0 0
    %2358 = vmatpush1.bf16.xpose.msra.mxu0 0
    %2359 = vmatprep.subr.bf16.mxu0 0
    %2360 = vmatpush1.bf16.xpose.msra.mxu0 0
    %2361 = vmatprep.subr.bf16.mxu0 0
    %2362 = vmatpush1.bf16.xpose.msra.mxu0 0
    %2363 = vmatprep.subr.bf16.mxu0 %v2338
    %2364 = vmatpush1.bf16.xpose.msra.mxu0 %v2337
    %2365 = vmatprep.subr.bf16.mxu0 0
    %2366 = vmatpush2.bf16.xpose.msra.mxu0 0
    %2367 = vmatprep.subr.bf16.mxu0 0
    %2368 = vmatpush2.bf16.xpose.msra.mxu0 0
    %2369 = vmatprep.subr.bf16.mxu0 0
    %2370 = vmatpush2.bf16.xpose.msra.mxu0 0
    %2371 = vmatprep.subr.bf16.mxu0 0
    %2372 = vmatpush2.bf16.xpose.msra.mxu0 0
    %2373 = vmatprep.subr.bf16.mxu0 0
    %2374 = vmatpush2.bf16.xpose.msra.mxu0 0
    %2375 = vmatprep.subr.bf16.mxu0 0
    %2376 = vmatpush2.bf16.xpose.msra.mxu0 0
    %2377 = vmatprep.subr.bf16.mxu0 0
    %2378 = vmatpush2.bf16.xpose.msra.mxu0 0
    %2379 = vmatprep.subr.bf16.mxu0 0
    %2380 = vmatpush2.bf16.xpose.msra.mxu0 0
    %2381 = vmatprep.mubr.bf16.mxu0 %v2336
    %2382 = vmatmul.mubr.bf16.gmra.mxu0 %v2335
    %v2383 = vpop.f32.mrf.mxu0
    %v2384 = vadd.f32 %v2348, %v2383
    %v2385 = vpop.f32.mrf.mxu0
    %v2386 = vpop.f32.mrf.mxu0
    %v2387 = vpop.f32.mrf.mxu0
    %2388 = vdwg.mxu0
    %v2389 = vxor.u32 %v2384, 2147483648
    %v2390 = vmul.f32 %v2389, 1.442695
    %v2391 = vpow.pop %v2390
    %v2392 = vadd.f32 %v2391, 1.0
    %v2393 = vrcp.pop %v2392
    %v2394 = vmul.f32 1.0, %v2393
    %vm2395 = vcmask 57344
    %2396 = vst.msk [vmem:[%s6] sm:$0x1] %vm2395, %v2394
    // Predicated region
    $region42: #{discriminator_forward.1} parent=1 // pred_check
      _
    $region43: #{discriminator_forward.1} parent=1 // pred_check_branch
      %2398 = sbr.rel (0) target = $region45
    $region44: #{discriminator_forward.1} parent=1 // pred_region
      _
    $region45: #{discriminator_forward.1} parent=1 // pred_fallthru
      _
    // Predicated region
    $region46: #{discriminator_forward.1} parent=1 // pred_check
      _
    $region47: #{discriminator_forward.1} parent=1 // pred_check_branch
      %2400 = sbr.rel (0) target = $region49
    $region48: #{discriminator_forward.1} parent=1 // pred_region
      _
    $region49: #{discriminator_forward.1} parent=1 // pred_fallthru
      _
    %2401 = vsyncpa [#allocation3], 1
    %2402 = vsyncpa [#allocation5], 1
    %2403 = vsyncpa [#allocation8], 1

</llo_original>
